<compile_context>
chip_gen: v7x
topology: tpu7x:2x2x1
jax: 0.10.0
libtpu: 0.0.40
codegen_flags: <defaults>
</compile_context>

<pallas_src>
import functools

import jax
import jax.numpy as jnp
from jax.experimental import pallas as pl
from jax.experimental.pallas import tpu as pltpu


# ----------------------------- helpers ---------------------------------------

def _round_up(x, m):
    return ((x + m - 1) // m) * m


def _pick_channel_block(cin, n_padded):
    """Channel-block size: a multiple of 8 dividing Cin with cb * N_pad >= 256 (MXU M-dim)."""
    divs = [c for c in range(8, cin + 1, 8) if cin % c == 0]
    if not divs:
        return cin
    big_enough = [c for c in divs if c * n_padded >= 256]
    return min(big_enough) if big_enough else max(divs)


def _const_spec(block_shape, index_map, single_buffer):
    """BlockSpec for grid-constant operands (their block index never changes).

    With `single_buffer` the dead second pipeline buffer is dropped via pl.Buffered(1);
    falls back to a plain BlockSpec if the installed jax does not accept pipeline_mode.
    """
    if single_buffer and hasattr(pl, "Buffered"):
        try:
            return pl.BlockSpec(block_shape, index_map, pipeline_mode=pl.Buffered(1))
        except TypeError:
            pass
    return pl.BlockSpec(block_shape, index_map)


# ----------------------------- fused kernel ----------------------------------

def _ppgn_fused_kernel(src_ref, dst_ref, spt_ref, w4_ref, w5_ref, w6a_ref, w6bt_ref,
                       out_ref, pt_scr, qt_scr, *, n_nodes, cb):
    p = pl.program_id(0)               # core-split axis ("parallel")
    kc = pl.program_id(1)              # channel-block axis ("arbitrary" / reduction)
    n = n_nodes                        # padded node count (multiple of 8)
    e = spt_ref.shape[-1]              # padded edge count (multiple of 128)

    # ---- once per core-split: build one-hot incidence matrices & seed the accumulator ----
    @pl.when(kc == 0)
    def _init():
        node_ids = jax.lax.broadcasted_iota(jnp.int32, (n, e), 0)
        pt_scr[...] = (node_ids == src_ref[...]).astype(jnp.float32)   # pt[i,e] = [src_e == i]
        qt_scr[...] = (node_ids == dst_ref[...]).astype(jnp.float32)   # qt[j,e] = [dst_e == j]
        # Seed with the W6a (SP) half of fc1_6 on split 0 only, zeros on the other split(s).
        seed = jnp.dot(w6a_ref[...], spt_ref[...], preferred_element_type=jnp.float32)
        out_ref[...] = seed * (p == 0).astype(seed.dtype)

    pt = pt_scr[...]                   # (N, E)
    qt = qt_scr[...]                   # (N, E)
    spt = spt_ref[...]                 # (Cin, E)

    # fc1_4 / fc1_5 for this channel block (the 1/Cin scale is folded into the weights).
    x_cm = jnp.dot(w4_ref[...], spt, preferred_element_type=jnp.float32)   # (cb, E)
    y_cm = jnp.dot(w5_ref[...], spt, preferred_element_type=jnp.float32)   # (cb, E)

    # Channel-stacked scatter: A[(c,i), j] = sum_{e:(src=i,dst=j)} X[e,c] (duplicates summed).
    xp = (x_cm[:, None, :] * pt[None, :, :]).reshape(cb * n, e)            # (cb*N, E)
    yp = (y_cm[:, None, :] * pt[None, :, :]).reshape(cb * n, e)            # (cb*N, E)
    ce = (((1,), (1,)), ((), ()))                                          # contract edge axis
    a_st = jax.lax.dot_general(xp, qt, ce, preferred_element_type=jnp.float32)   # (cb*N, N)
    b_st = jax.lax.dot_general(yp, qt, ce, preferred_element_type=jnp.float32)   # (cb*N, N)

    # Tiny per-channel A_c @ B_c products (N x N each) -- bounded unrolled loop (cb <= ~16).
    m_blocks = []
    for c in range(cb):
        rs = c * n
        m_blocks.append(jnp.dot(a_st[rs:rs + n, :], b_st[rs:rs + n, :],
                                preferred_element_type=jnp.float32))
    m_st = jnp.concatenate(m_blocks, axis=0)                               # (cb*N, N)

    # Channel-stacked gather of M_c[src_e, dst_e] for every edge.
    g_st = jnp.dot(m_st, qt, preferred_element_type=jnp.float32)           # (cb*N, E): M[c,i,dst_e]
    tmp = jnp.sum(g_st.reshape(cb, n, e) * pt[None, :, :], axis=1)         # (cb, E):   M[c,src_e,dst_e]

    # Running fc1_6 accumulation (the concat([SP, tmp]) is never materialized).
    out_ref[...] += jax.lax.dot_general(
        w6bt_ref[...], tmp, (((0,), (0,)), ((), ())),
        preferred_element_type=jnp.float32)                                # (Cout_pad, E_pad)


# ----------------------------- wrapper ----------------------------------------

def ppgn_layer_forward(edge_index, SP, W4, W5, W6, num_nodes,
                       channel_block=None, num_core_splits=None,
                       single_buffer_constants=False):
    """Forward of PPGNLayer (learnedge=True).

    edge_index: (2, E) int32; SP: (E, Cin) f32; W4, W5: (Cin, Cin); W6: (Cout, 2*Cin).
    num_nodes / channel_block / num_core_splits / single_buffer_constants are static.
    Returns (E, Cout) like the PyTorch module.
    """
    E, Cin = SP.shape
    Cout = W6.shape[0]
    N = int(num_nodes)

    # Padded geometry: lanes (edges) to 128, sublanes (nodes / out channels) to 8.
    Ep = _round_up(max(E, 128), 128)
    Np = _round_up(max(N, 8), 8)
    Coutp = _round_up(Cout, 8)

    cb = int(channel_block) if channel_block is not None else 0
    if cb <= 0 or Cin % cb != 0 or (cb != Cin and cb % 8 != 0):
        cb = _pick_channel_block(Cin, Np)
    kb = Cin // cb                                        # number of channel blocks

    if num_core_splits is not None:
        nsplit = int(num_core_splits)
    else:
        nsplit = 2 if (kb % 2 == 0 and kb >= 2) else 1    # feed v7x's 2nd TensorCore
    if nsplit < 1 or kb % nsplit != 0:
        nsplit = 1
    kbp = kb // nsplit                                    # channel blocks per core-split

    # Pad & lay out operands.  Sentinel edges (src = dst = Np) have all-zero one-hot columns,
    # so padded lanes contribute exactly zero everywhere.
    src = jnp.full((1, Ep), Np, jnp.int32).at[0, :E].set(edge_index[0].astype(jnp.int32))
    dst = jnp.full((1, Ep), Np, jnp.int32).at[0, :E].set(edge_index[1].astype(jnp.int32))
    SP_T = jnp.zeros((Cin, Ep), jnp.float32).at[:, :E].set(SP.astype(jnp.float32).T)

    inv_c = 1.0 / float(Cin)                              # fold 1/nedgeinput into W4 / W5
    W4s = W4.astype(jnp.float32) * inv_c
    W5s = W5.astype(jnp.float32) * inv_c
    W6a = jnp.zeros((Coutp, Cin), jnp.float32).at[:Cout, :].set(W6[:, :Cin].astype(jnp.float32))
    W6bT = jnp.zeros((Cin, Coutp), jnp.float32).at[:, :Cout].set(W6[:, Cin:].astype(jnp.float32).T)

    # Per-generation VMEM budget: <= 3/4 of physical, capped at 96 MiB (48 MiB on v7x).
    try:
        vmem_cap = int(pltpu.get_tpu_info().vmem_capacity_bytes)
    except Exception:
        vmem_cap = 64 * 1024 * 1024
    vmem_limit = max(32 * 1024 * 1024, min(96 * 1024 * 1024, (vmem_cap * 3) // 4))

    kernel = functools.partial(_ppgn_fused_kernel, n_nodes=Np, cb=cb)
    sb = bool(single_buffer_constants)

    out2d = pl.pallas_call(
        kernel,
        out_shape=jax.ShapeDtypeStruct((nsplit * Coutp, Ep), jnp.float32),
        grid_spec=pltpu.PrefetchScalarGridSpec(
            num_scalar_prefetch=0,
            grid=(nsplit, kbp),
            in_specs=[
                _const_spec((1, Ep), lambda p, kc: (0, 0), sb),              # src ids
                _const_spec((1, Ep), lambda p, kc: (0, 0), sb),              # dst ids
                _const_spec((Cin, Ep), lambda p, kc: (0, 0), sb),            # SP^T (all channels)
                pl.BlockSpec((cb, Cin), lambda p, kc: (p * kbp + kc, 0)),    # W4 rows of this block
                pl.BlockSpec((cb, Cin), lambda p, kc: (p * kbp + kc, 0)),    # W5 rows of this block
                _const_spec((Coutp, Cin), lambda p, kc: (0, 0), sb),         # W6[:, :Cin] (padded)
                pl.BlockSpec((cb, Coutp), lambda p, kc: (p * kbp + kc, 0)),  # W6[:, Cin:]^T rows
            ],
            out_specs=pl.BlockSpec((Coutp, Ep), lambda p, kc: (p, 0)),       # per-split slab (resident over kc)
            scratch_shapes=[
                pltpu.VMEM((Np, Ep), jnp.float32),                           # pt one-hot (src)
                pltpu.VMEM((Np, Ep), jnp.float32),                           # qt one-hot (dst)
            ],
        ),
        compiler_params=pltpu.CompilerParams(
            dimension_semantics=("parallel", "arbitrary"),
            vmem_limit_bytes=int(vmem_limit),
        ),
    )(src, dst, SP_T, W4s, W5s, W6a, W6bT)

    # Tiny epilogue: combine per-core partial slabs, ReLU, unpad, back to (E, Cout).
    out = jax.nn.relu(out2d.reshape(nsplit, Coutp, Ep).sum(axis=0))
    return out[:Cout, :E].T


# ----------------------------- pure-JAX reference -----------------------------

def ppgn_layer_ref(edge_index, SP, W4, W5, W6, num_nodes):
    Cin = SP.shape[1]
    src, dst = edge_index[0], edge_index[1]
    x = SP @ W4.T / Cin
    y = SP @ W5.T / Cin
    # duplicate edges are summed (torch.sparse coalesce semantics), matching the kernel
    A = jnp.zeros((Cin, num_nodes, num_nodes), jnp.float32).at[:, src, dst].add(x.T)
    B = jnp.zeros((Cin, num_nodes, num_nodes), jnp.float32).at[:, src, dst].add(y.T)
    M = jnp.einsum("cik,ckj->cij", A, B)
    tmp = jnp.concatenate([SP, M[:, src, dst].T], axis=1)
    return jax.nn.relu(tmp @ W6.T)


if __name__ == "__main__":
    # Small synthetic problem: one complete graph with self-loops, deliberately NOT aligned to
    # TPU tiles (N=12 -> E=144, Cout=20) so the padding / sentinel-edge path is exercised.
    N = 12
    Cin = 16                  # nedgeinput
    Cout = 20                 # nedgeoutput
    E = N * N                 # 144 edges

    key = jax.random.PRNGKey(0)
    k_sp, k_w4, k_w5, k_w6 = jax.random.split(key, 4)

    ii, jj = jnp.meshgrid(jnp.arange(N), jnp.arange(N), indexing="ij")
    edge_index = jnp.stack([ii.reshape(-1), jj.reshape(-1)]).astype(jnp.int32)   # (2, E)

    SP = jax.random.normal(k_sp, (E, Cin), dtype=jnp.float32)

    # torch.nn.Linear(bias=False)-style init: U(-1/sqrt(fan_in), 1/sqrt(fan_in))
    b4 = 1.0 / (Cin ** 0.5)
    b6 = 1.0 / ((2 * Cin) ** 0.5)
    W4 = jax.random.uniform(k_w4, (Cin, Cin), jnp.float32, -b4, b4)
    W5 = jax.random.uniform(k_w5, (Cin, Cin), jnp.float32, -b4, b4)
    W6 = jax.random.uniform(k_w6, (Cout, 2 * Cin), jnp.float32, -b6, b6)

    fwd = jax.jit(ppgn_layer_forward, static_argnums=(5, 6, 7, 8))
    ref = ppgn_layer_ref(edge_index, SP, W4, W5, W6, N)

    # config 1: cb=8 -> two channel blocks, two core-splits ("parallel" axis feeds v7x's 2nd TC)
    out1 = jax.block_until_ready(fwd(edge_index, SP, W4, W5, W6, N, 8, None, False))
    # config 2: auto channel block (cb == Cin here), single split
    out2 = jax.block_until_ready(fwd(edge_index, SP, W4, W5, W6, N, None, 1, False))

    assert out1.shape == (E, Cout), out1.shape
    assert out2.shape == (E, Cout), out2.shape
    assert jnp.allclose(out1, ref, atol=1e-4, rtol=1e-4), "config 1 mismatch vs reference"
    assert jnp.allclose(out2, ref, atol=1e-4, rtol=1e-4), "config 2 mismatch vs reference"

    print("KERNEL_OK")
</pallas_src>

<mosaic_0001>
module attributes {stable_mosaic.version = 11 : i64} {
  func.func @_ppgn_fused_kernel(%arg0: i32, %arg1: i32, %arg2: memref<1x256xi32, #tpu.memory_space<vmem>>, %arg3: memref<1x256xi32, #tpu.memory_space<vmem>>, %arg4: memref<16x256xf32, #tpu.memory_space<vmem>>, %arg5: memref<8x16xf32, #tpu.memory_space<vmem>>, %arg6: memref<8x16xf32, #tpu.memory_space<vmem>>, %arg7: memref<24x16xf32, #tpu.memory_space<vmem>>, %arg8: memref<8x24xf32, #tpu.memory_space<vmem>>, %arg9: memref<24x256xf32, #tpu.memory_space<vmem>>, %arg10: memref<16x256xf32, #tpu.memory_space<vmem>>, %arg11: memref<16x256xf32, #tpu.memory_space<vmem>>) attributes {dimension_semantics = [#tpu.dimension_semantics<parallel>, #tpu.dimension_semantics<arbitrary>], iteration_bounds = array<i64: 2, 1>, scalar_prefetch = 0 : i64, scratch_operands = 2 : i64, tpu.core_type = #tpu.core_type<tc>, window_params = [{pipeline_mode = #tpu.pipeline_mode<synchronous>, transform_indices = @transform_0, window_bounds = array<i64: 1, 256>}, {pipeline_mode = #tpu.pipeline_mode<synchronous>, transform_indices = @transform_1, window_bounds = array<i64: 1, 256>}, {pipeline_mode = #tpu.pipeline_mode<synchronous>, transform_indices = @transform_2, window_bounds = array<i64: 16, 256>}, {transform_indices = @transform_3, window_bounds = array<i64: 8, 16>}, {transform_indices = @transform_4, window_bounds = array<i64: 8, 16>}, {pipeline_mode = #tpu.pipeline_mode<synchronous>, transform_indices = @transform_5, window_bounds = array<i64: 24, 16>}, {transform_indices = @transform_6, window_bounds = array<i64: 8, 24>}, {transform_indices = @transform_7, window_bounds = array<i64: 24, 256>}]} {
    %c0_i32 = arith.constant 0 : i32
    %0 = arith.cmpi eq, %arg1, %c0_i32 : i32
    %1 = arith.extui %0 : i1 to i32
    %c0_i32_0 = arith.constant 0 : i32
    %2 = arith.cmpi ne, %1, %c0_i32_0 : i32
    scf.if %2 {
      %60 = tpu.iota {dimensions = array<i32: 0>} : vector<16x256xi32>
      %c0_30 = arith.constant 0 : index
      %c0_31 = arith.constant 0 : index
      %61 = vector.load %arg2[%c0_30, %c0_31] : memref<1x256xi32, #tpu.memory_space<vmem>>, vector<1x256xi32>
      %62 = vector.broadcast %61 : vector<1x256xi32> to vector<16x256xi32>
      %63 = arith.cmpi eq, %60, %62 : vector<16x256xi32>
      %64 = arith.extui %63 : vector<16x256xi1> to vector<16x256xi32>
      %65 = arith.sitofp %64 : vector<16x256xi32> to vector<16x256xf32>
      %c0_32 = arith.constant 0 : index
      %c0_33 = arith.constant 0 : index
      %66 = vector.load %arg10[%c0_32, %c0_33] : memref<16x256xf32, #tpu.memory_space<vmem>>, vector<16x256xf32>
      tpu.vector_store %arg10[%c0_32, %c0_33], %65 {strides = array<i32>} : memref<16x256xf32, #tpu.memory_space<vmem>>, vector<16x256xf32>,
      %c0_34 = arith.constant 0 : index
      %c0_35 = arith.constant 0 : index
      %67 = vector.load %arg3[%c0_34, %c0_35] : memref<1x256xi32, #tpu.memory_space<vmem>>, vector<1x256xi32>
      %68 = vector.broadcast %67 : vector<1x256xi32> to vector<16x256xi32>
      %69 = arith.cmpi eq, %60, %68 : vector<16x256xi32>
      %70 = arith.extui %69 : vector<16x256xi1> to vector<16x256xi32>
      %71 = arith.sitofp %70 : vector<16x256xi32> to vector<16x256xf32>
      %c0_36 = arith.constant 0 : index
      %c0_37 = arith.constant 0 : index
      %72 = vector.load %arg11[%c0_36, %c0_37] : memref<16x256xf32, #tpu.memory_space<vmem>>, vector<16x256xf32>
      tpu.vector_store %arg11[%c0_36, %c0_37], %71 {strides = array<i32>} : memref<16x256xf32, #tpu.memory_space<vmem>>, vector<16x256xf32>,
      %c0_38 = arith.constant 0 : index
      %c0_39 = arith.constant 0 : index
      %73 = vector.load %arg7[%c0_38, %c0_39] : memref<24x16xf32, #tpu.memory_space<vmem>>, vector<24x16xf32>
      %c0_40 = arith.constant 0 : index
      %c0_41 = arith.constant 0 : index
      %74 = vector.load %arg4[%c0_40, %c0_41] : memref<16x256xf32, #tpu.memory_space<vmem>>, vector<16x256xf32>
      %cst_42 = arith.constant dense<0.000000e+00> : vector<24x256xf32>
      %75 = tpu.matmul %73, %74, %cst_42 {dimension_numbers = #tpu.dot_dimension_numbers<[1], [0], [0], [1], [0, 0, 1, 1], [], []>} : vector<24x16xf32>, vector<16x256xf32>, vector<24x256xf32> -> vector<24x256xf32>
      %c0_i32_43 = arith.constant 0 : i32
      %76 = arith.cmpi eq, %arg0, %c0_i32_43 : i32
      %77 = arith.extui %76 : i1 to i32
      %78 = arith.sitofp %77 : i32 to f32
      %79 = vector.broadcast %78 : f32 to vector<24x256xf32>
      %80 = arith.mulf %75, %79 : vector<24x256xf32>
      %c0_44 = arith.constant 0 : index
      %c0_45 = arith.constant 0 : index
      %81 = vector.load %arg9[%c0_44, %c0_45] : memref<24x256xf32, #tpu.memory_space<vmem>>, vector<24x256xf32>
      tpu.vector_store %arg9[%c0_44, %c0_45], %80 {strides = array<i32>} : memref<24x256xf32, #tpu.memory_space<vmem>>, vector<24x256xf32>,
    } else {
    }
    %c0 = arith.constant 0 : index
    %c0_1 = arith.constant 0 : index
    %3 = vector.load %arg10[%c0, %c0_1] : memref<16x256xf32, #tpu.memory_space<vmem>>, vector<16x256xf32>
    %c0_2 = arith.constant 0 : index
    %c0_3 = arith.constant 0 : index
    %4 = vector.load %arg11[%c0_2, %c0_3] : memref<16x256xf32, #tpu.memory_space<vmem>>, vector<16x256xf32>
    %c0_4 = arith.constant 0 : index
    %c0_5 = arith.constant 0 : index
    %5 = vector.load %arg4[%c0_4, %c0_5] : memref<16x256xf32, #tpu.memory_space<vmem>>, vector<16x256xf32>
    %c0_6 = arith.constant 0 : index
    %c0_7 = arith.constant 0 : index
    %6 = vector.load %arg5[%c0_6, %c0_7] : memref<8x16xf32, #tpu.memory_space<vmem>>, vector<8x16xf32>
    %cst = arith.constant dense<0.000000e+00> : vector<8x256xf32>
    %7 = tpu.matmul %6, %5, %cst {dimension_numbers = #tpu.dot_dimension_numbers<[1], [0], [0], [1], [0, 0, 1, 1], [], []>} : vector<8x16xf32>, vector<16x256xf32>, vector<8x256xf32> -> vector<8x256xf32>
    %c0_8 = arith.constant 0 : index
    %c0_9 = arith.constant 0 : index
    %8 = vector.load %arg6[%c0_8, %c0_9] : memref<8x16xf32, #tpu.memory_space<vmem>>, vector<8x16xf32>
    %cst_10 = arith.constant dense<0.000000e+00> : vector<8x256xf32>
    %9 = tpu.matmul %8, %5, %cst_10 {dimension_numbers = #tpu.dot_dimension_numbers<[1], [0], [0], [1], [0, 0, 1, 1], [], []>} : vector<8x16xf32>, vector<16x256xf32>, vector<8x256xf32> -> vector<8x256xf32>
    %10 = vector.shape_cast %7 : vector<8x256xf32> to vector<8x1x256xf32>
    %11 = vector.shape_cast %3 : vector<16x256xf32> to vector<1x16x256xf32>
    %12 = vector.broadcast %10 : vector<8x1x256xf32> to vector<8x16x256xf32>
    %13 = vector.broadcast %11 : vector<1x16x256xf32> to vector<8x16x256xf32>
    %14 = arith.mulf %12, %13 : vector<8x16x256xf32>
    %15 = vector.shape_cast %14 : vector<8x16x256xf32> to vector<128x256xf32>
    %16 = vector.shape_cast %9 : vector<8x256xf32> to vector<8x1x256xf32>
    %17 = vector.shape_cast %3 : vector<16x256xf32> to vector<1x16x256xf32>
    %18 = vector.broadcast %16 : vector<8x1x256xf32> to vector<8x16x256xf32>
    %19 = vector.broadcast %17 : vector<1x16x256xf32> to vector<8x16x256xf32>
    %20 = arith.mulf %18, %19 : vector<8x16x256xf32>
    %21 = vector.shape_cast %20 : vector<8x16x256xf32> to vector<128x256xf32>
    %cst_11 = arith.constant dense<0.000000e+00> : vector<128x16xf32>
    %22 = tpu.matmul %15, %4, %cst_11 {dimension_numbers = #tpu.dot_dimension_numbers<[1], [1], [0], [0], [0, 0, 1, 0], [], []>} : vector<128x256xf32>, vector<16x256xf32>, vector<128x16xf32> -> vector<128x16xf32>
    %cst_12 = arith.constant dense<0.000000e+00> : vector<128x16xf32>
    %23 = tpu.matmul %21, %4, %cst_12 {dimension_numbers = #tpu.dot_dimension_numbers<[1], [1], [0], [0], [0, 0, 1, 0], [], []>} : vector<128x256xf32>, vector<16x256xf32>, vector<128x16xf32> -> vector<128x16xf32>
    %24 = vector.extract_strided_slice %22 {offsets = [0, 0], sizes = [16, 16], strides = [1, 1]} : vector<128x16xf32> to vector<16x16xf32>
    %25 = vector.extract_strided_slice %23 {offsets = [0, 0], sizes = [16, 16], strides = [1, 1]} : vector<128x16xf32> to vector<16x16xf32>
    %cst_13 = arith.constant dense<0.000000e+00> : vector<16x16xf32>
    %26 = tpu.matmul %24, %25, %cst_13 {dimension_numbers = #tpu.dot_dimension_numbers<[1], [0], [0], [1], [0, 0, 1, 1], [], []>} : vector<16x16xf32>, vector<16x16xf32>, vector<16x16xf32> -> vector<16x16xf32>
    %27 = vector.extract_strided_slice %22 {offsets = [16, 0], sizes = [16, 16], strides = [1, 1]} : vector<128x16xf32> to vector<16x16xf32>
    %28 = vector.extract_strided_slice %23 {offsets = [16, 0], sizes = [16, 16], strides = [1, 1]} : vector<128x16xf32> to vector<16x16xf32>
    %cst_14 = arith.constant dense<0.000000e+00> : vector<16x16xf32>
    %29 = tpu.matmul %27, %28, %cst_14 {dimension_numbers = #tpu.dot_dimension_numbers<[1], [0], [0], [1], [0, 0, 1, 1], [], []>} : vector<16x16xf32>, vector<16x16xf32>, vector<16x16xf32> -> vector<16x16xf32>
    %30 = vector.extract_strided_slice %22 {offsets = [32, 0], sizes = [16, 16], strides = [1, 1]} : vector<128x16xf32> to vector<16x16xf32>
    %31 = vector.extract_strided_slice %23 {offsets = [32, 0], sizes = [16, 16], strides = [1, 1]} : vector<128x16xf32> to vector<16x16xf32>
    %cst_15 = arith.constant dense<0.000000e+00> : vector<16x16xf32>
    %32 = tpu.matmul %30, %31, %cst_15 {dimension_numbers = #tpu.dot_dimension_numbers<[1], [0], [0], [1], [0, 0, 1, 1], [], []>} : vector<16x16xf32>, vector<16x16xf32>, vector<16x16xf32> -> vector<16x16xf32>
    %33 = vector.extract_strided_slice %22 {offsets = [48, 0], sizes = [16, 16], strides = [1, 1]} : vector<128x16xf32> to vector<16x16xf32>
    %34 = vector.extract_strided_slice %23 {offsets = [48, 0], sizes = [16, 16], strides = [1, 1]} : vector<128x16xf32> to vector<16x16xf32>
    %cst_16 = arith.constant dense<0.000000e+00> : vector<16x16xf32>
    %35 = tpu.matmul %33, %34, %cst_16 {dimension_numbers = #tpu.dot_dimension_numbers<[1], [0], [0], [1], [0, 0, 1, 1], [], []>} : vector<16x16xf32>, vector<16x16xf32>, vector<16x16xf32> -> vector<16x16xf32>
    %36 = vector.extract_strided_slice %22 {offsets = [64, 0], sizes = [16, 16], strides = [1, 1]} : vector<128x16xf32> to vector<16x16xf32>
    %37 = vector.extract_strided_slice %23 {offsets = [64, 0], sizes = [16, 16], strides = [1, 1]} : vector<128x16xf32> to vector<16x16xf32>
    %cst_17 = arith.constant dense<0.000000e+00> : vector<16x16xf32>
    %38 = tpu.matmul %36, %37, %cst_17 {dimension_numbers = #tpu.dot_dimension_numbers<[1], [0], [0], [1], [0, 0, 1, 1], [], []>} : vector<16x16xf32>, vector<16x16xf32>, vector<16x16xf32> -> vector<16x16xf32>
    %39 = vector.extract_strided_slice %22 {offsets = [80, 0], sizes = [16, 16], strides = [1, 1]} : vector<128x16xf32> to vector<16x16xf32>
    %40 = vector.extract_strided_slice %23 {offsets = [80, 0], sizes = [16, 16], strides = [1, 1]} : vector<128x16xf32> to vector<16x16xf32>
    %cst_18 = arith.constant dense<0.000000e+00> : vector<16x16xf32>
    %41 = tpu.matmul %39, %40, %cst_18 {dimension_numbers = #tpu.dot_dimension_numbers<[1], [0], [0], [1], [0, 0, 1, 1], [], []>} : vector<16x16xf32>, vector<16x16xf32>, vector<16x16xf32> -> vector<16x16xf32>
    %42 = vector.extract_strided_slice %22 {offsets = [96, 0], sizes = [16, 16], strides = [1, 1]} : vector<128x16xf32> to vector<16x16xf32>
    %43 = vector.extract_strided_slice %23 {offsets = [96, 0], sizes = [16, 16], strides = [1, 1]} : vector<128x16xf32> to vector<16x16xf32>
    %cst_19 = arith.constant dense<0.000000e+00> : vector<16x16xf32>
    %44 = tpu.matmul %42, %43, %cst_19 {dimension_numbers = #tpu.dot_dimension_numbers<[1], [0], [0], [1], [0, 0, 1, 1], [], []>} : vector<16x16xf32>, vector<16x16xf32>, vector<16x16xf32> -> vector<16x16xf32>
    %45 = vector.extract_strided_slice %22 {offsets = [112, 0], sizes = [16, 16], strides = [1, 1]} : vector<128x16xf32> to vector<16x16xf32>
    %46 = vector.extract_strided_slice %23 {offsets = [112, 0], sizes = [16, 16], strides = [1, 1]} : vector<128x16xf32> to vector<16x16xf32>
    %cst_20 = arith.constant dense<0.000000e+00> : vector<16x16xf32>
    %47 = tpu.matmul %45, %46, %cst_20 {dimension_numbers = #tpu.dot_dimension_numbers<[1], [0], [0], [1], [0, 0, 1, 1], [], []>} : vector<16x16xf32>, vector<16x16xf32>, vector<16x16xf32> -> vector<16x16xf32>
    %48 = tpu.concatenate %26, %29, %32, %35, %38, %41, %44, %47 in 0 : vector<16x16xf32>, vector<16x16xf32>, vector<16x16xf32>, vector<16x16xf32>, vector<16x16xf32>, vector<16x16xf32>, vector<16x16xf32>, vector<16x16xf32> -> vector<128x16xf32>
    %cst_21 = arith.constant dense<0.000000e+00> : vector<128x256xf32>
    %49 = tpu.matmul %48, %4, %cst_21 {dimension_numbers = #tpu.dot_dimension_numbers<[1], [0], [0], [1], [0, 0, 1, 1], [], []>} : vector<128x16xf32>, vector<16x256xf32>, vector<128x256xf32> -> vector<128x256xf32>
    %50 = vector.shape_cast %49 : vector<128x256xf32> to vector<8x16x256xf32>
    %51 = vector.shape_cast %3 : vector<16x256xf32> to vector<1x16x256xf32>
    %52 = vector.broadcast %51 : vector<1x16x256xf32> to vector<8x16x256xf32>
    %53 = arith.mulf %50, %52 : vector<8x16x256xf32>
    %cst_22 = arith.constant dense<0.000000e+00> : vector<8x256xf32>
    %54 = vector.multi_reduction <add>, %53, %cst_22 [1] : vector<8x16x256xf32> to vector<8x256xf32>
    %c0_23 = arith.constant 0 : index
    %c0_24 = arith.constant 0 : index
    %55 = vector.load %arg9[%c0_23, %c0_24] : memref<24x256xf32, #tpu.memory_space<vmem>>, vector<24x256xf32>
    %c0_25 = arith.constant 0 : index
    %c0_26 = arith.constant 0 : index
    %56 = vector.load %arg8[%c0_25, %c0_26] : memref<8x24xf32, #tpu.memory_space<vmem>>, vector<8x24xf32>
    %cst_27 = arith.constant dense<0.000000e+00> : vector<24x256xf32>
    %57 = tpu.matmul %56, %54, %cst_27 {dimension_numbers = #tpu.dot_dimension_numbers<[0], [0], [1], [1], [0, 1, 1, 1], [], []>} : vector<8x24xf32>, vector<8x256xf32>, vector<24x256xf32> -> vector<24x256xf32>
    %58 = arith.addf %55, %57 : vector<24x256xf32>
    %c0_28 = arith.constant 0 : index
    %c0_29 = arith.constant 0 : index
    %59 = vector.load %arg9[%c0_28, %c0_29] : memref<24x256xf32, #tpu.memory_space<vmem>>, vector<24x256xf32>
    tpu.vector_store %arg9[%c0_28, %c0_29], %58 {strides = array<i32>} : memref<24x256xf32, #tpu.memory_space<vmem>>, vector<24x256xf32>,
    return
  }
  func.func @transform_0(%arg0: i32, %arg1: i32) -> (i32, i32) {
    %c0_i32 = arith.constant 0 : i32
    %c0_i32_0 = arith.constant 0 : i32
    %c0_i32_1 = arith.constant 0 : i32
    return %c0_i32, %c0_i32_0 : i32, i32
  }
  func.func @transform_1(%arg0: i32, %arg1: i32) -> (i32, i32) {
    %c0_i32 = arith.constant 0 : i32
    %c0_i32_0 = arith.constant 0 : i32
    %c0_i32_1 = arith.constant 0 : i32
    return %c0_i32, %c0_i32_0 : i32, i32
  }
  func.func @transform_2(%arg0: i32, %arg1: i32) -> (i32, i32) {
    %c0_i32 = arith.constant 0 : i32
    %c0_i32_0 = arith.constant 0 : i32
    %c0_i32_1 = arith.constant 0 : i32
    return %c0_i32, %c0_i32_0 : i32, i32
  }
  func.func @transform_3(%arg0: i32, %arg1: i32) -> (i32, i32) {
    %c1_i32 = arith.constant 1 : i32
    %0 = arith.muli %arg0, %c1_i32 : i32
    %1 = arith.addi %0, %arg1 : i32
    %c0_i32 = arith.constant 0 : i32
    %c0_i32_0 = arith.constant 0 : i32
    return %1, %c0_i32 : i32, i32
  }
  func.func @transform_4(%arg0: i32, %arg1: i32) -> (i32, i32) {
    %c1_i32 = arith.constant 1 : i32
    %0 = arith.muli %arg0, %c1_i32 : i32
    %1 = arith.addi %0, %arg1 : i32
    %c0_i32 = arith.constant 0 : i32
    %c0_i32_0 = arith.constant 0 : i32
    return %1, %c0_i32 : i32, i32
  }
  func.func @transform_5(%arg0: i32, %arg1: i32) -> (i32, i32) {
    %c0_i32 = arith.constant 0 : i32
    %c0_i32_0 = arith.constant 0 : i32
    %c0_i32_1 = arith.constant 0 : i32
    return %c0_i32, %c0_i32_0 : i32, i32
  }
  func.func @transform_6(%arg0: i32, %arg1: i32) -> (i32, i32) {
    %c1_i32 = arith.constant 1 : i32
    %0 = arith.muli %arg0, %c1_i32 : i32
    %1 = arith.addi %0, %arg1 : i32
    %c0_i32 = arith.constant 0 : i32
    %c0_i32_0 = arith.constant 0 : i32
    return %1, %c0_i32 : i32, i32
  }
  func.func @transform_7(%arg0: i32, %arg1: i32) -> (i32, i32) {
    %c0_i32 = arith.constant 0 : i32
    %c0_i32_0 = arith.constant 0 : i32
    return %arg0, %c0_i32 : i32, i32
  }
}

</mosaic_0001>

<llo_original>
// kernel: ppgn_layer_forward.1
$region0: #{ppgn_layer_forward.1}
  #allocation0 [shape = 'u32[]', space=smem, size = 0x4, offset = 0x4, fixed_abs, tag = 'smem constant byte address 0x4 - core index']
  #allocation1 [shape = 'u32[144,128]{1,0:T(1,128)}', space=vmem, size = 0x12000, scoped, tag = 'internal scratch']
  #allocation2 [shape = 'f32[16,256]{1,0:T(8,128)}', space=vmem, size = 0x4000, scoped, tag = 'scratch operand']
  #allocation3 [shape = 'f32[16,256]{1,0:T(8,128)}', space=vmem, size = 0x4000, scoped, tag = 'scratch operand']
  %s0 = inlined_call_operand.vmem [shape: s32[1,256], index: 0, kind: input, shape index: {}]
  %s1 = inlined_call_operand.vmem [shape: s32[1,256], index: 1, kind: input, shape index: {}]
  %s2 = inlined_call_operand.vmem [shape: f32[16,256], index: 2, kind: input, shape index: {}]
  %s3 = inlined_call_operand.vmem [shape: f32[16,16], index: 3, kind: input, shape index: {}]
  %s4 = inlined_call_operand.vmem [shape: f32[16,16], index: 4, kind: input, shape index: {}]
  %s5 = inlined_call_operand.vmem [shape: f32[24,16], index: 5, kind: input, shape index: {}]
  %s6 = inlined_call_operand.vmem [shape: f32[16,24], index: 6, kind: input, shape index: {}]
  %s7 = inlined_call_operand.vmem [shape: f32[48,256], index: 7, kind: output, shape index: {}]
  %s8 = sld [smem:[#allocation0]]
  $region65: #{ppgn_layer_forward.1} parent=0
    _
  %s10 = ssub.s32 1, %s8
  %s11 = scalar_select 0, %s10, %s8
  loop: start=0, step=1, limit=4
  $region2: #{ppgn_layer_forward.1} parent=0 // loop_pre_header
    _
  $region3: #{ppgn_layer_forward.1} parent=0 // loop_header
    %s13 = sphi 0, %s17
    %p14 = scmp.ge.s32.totalorder %s13, 4
    %s20 = sphi 0, %s32
    %s21 = sphi 0, %s28
    %s22 = sphi 0, %s20
    %s23 = sphi 0, %s21
    %s24 = sphi 0, %s22
    %s25 = sphi 0, %s23
    %s33 = sphi 0, %s33
    %s35 = sphi 0, %s33
    %s36 = sphi 0, %s35
    %s50 = sphi 0, %s36
    %s54 = sphi 0, %s54
    %s56 = sphi 0, %s54
    %s57 = sphi 0, %s56
    %s71 = sphi 0, %s57
    %s75 = sphi 0, %s75
    %s77 = sphi 0, %s75
    %s78 = sphi 0, %s77
    %s92 = sphi 0, %s78
    %s100 = sphi 0, %s102
    %s103 = sphi 0, %s100
    %s104 = sphi 0, %s103
    %s120 = sphi 0, %s104
    %s128 = sphi 0, %s130
    %s131 = sphi 0, %s128
    %s132 = sphi 0, %s131
    %s148 = sphi 0, %s132
    %s152 = sphi 0, %s152
    %s154 = sphi 0, %s152
    %s155 = sphi 0, %s154
    %s169 = sphi 0, %s155
    %s177 = sphi 0, %s179
    %s180 = sphi 0, %s177
    %s181 = sphi 0, %s180
    %s197 = sphi 0, %s181
    %s203 = sphi 0, %s205
    %s206 = sphi 0, %s203
    %s207 = sphi 0, %s206
    %s223 = sphi 0, %s207
  $region4: #{ppgn_layer_forward.1} parent=0 // loop_header_branch
    %16 = sbr.rel (%p14) target = $region8
  $region5: #{ppgn_layer_forward.1} parent=0 // loop_body
    %s18 = ssub.s32 %s13, 1
    %s19 = ssub.s32 %s13, 2
    %s26 = sadd.s32 1, %s21
    %p27 = scmp.ge.s32.totalorder %s26, 1
    %s28 = scalar_select %p27, 0, %s26
    %s29 = sadd.s32 1, %s20
    %s30 = scalar_select %p27, %s29, %s20
    %p31 = scmp.ge.s32.totalorder %s30, 2
    %s32 = scalar_select %p31, 0, %s30
    %s34 = sadd.s32 %s33, 1
    %p37 = scmp.eq.s32.totalorder %s13, 1
    %p38 = scmp.ne.s32.totalorder %s33, %s35
    %p39 = scmp.eq.s32.totalorder %s13, 0
    %p40 = por %p38, %p39
    %p41 = scmp.ne.s32.totalorder %s33, %s35
    %p42 = scmp.eq.s32.totalorder %s18, 1
    %p43 = por %p41, %p42
    %p44 = scmp.ne.s32.totalorder %s35, %s36
    %p45 = scmp.eq.s32.totalorder %s18, 0
    %p46 = por %p44, %p45
    %p47 = scmp.ne.s32.totalorder %s35, %s36
    %p48 = scmp.eq.s32.totalorder %s19, 1
    %p49 = por %p47, %p48
    %p51 = scmp.ne.s32.totalorder %s36, %s50
    %p52 = scmp.eq.s32.totalorder %s19, 0
    %p53 = por %p51, %p52
    %s55 = sadd.s32 %s54, 1
    %p58 = scmp.eq.s32.totalorder %s13, 1
    %p59 = scmp.ne.s32.totalorder %s54, %s56
    %p60 = scmp.eq.s32.totalorder %s13, 0
    %p61 = por %p59, %p60
    %p62 = scmp.ne.s32.totalorder %s54, %s56
    %p63 = scmp.eq.s32.totalorder %s18, 1
    %p64 = por %p62, %p63
    %p65 = scmp.ne.s32.totalorder %s56, %s57
    %p66 = scmp.eq.s32.totalorder %s18, 0
    %p67 = por %p65, %p66
    %p68 = scmp.ne.s32.totalorder %s56, %s57
    %p69 = scmp.eq.s32.totalorder %s19, 1
    %p70 = por %p68, %p69
    %p72 = scmp.ne.s32.totalorder %s57, %s71
    %p73 = scmp.eq.s32.totalorder %s19, 0
    %p74 = por %p72, %p73
    %s76 = sadd.s32 %s75, 1
    %p79 = scmp.eq.s32.totalorder %s13, 1
    %p80 = scmp.ne.s32.totalorder %s75, %s77
    %p81 = scmp.eq.s32.totalorder %s13, 0
    %p82 = por %p80, %p81
    %p83 = scmp.ne.s32.totalorder %s75, %s77
    %p84 = scmp.eq.s32.totalorder %s18, 1
    %p85 = por %p83, %p84
    %p86 = scmp.ne.s32.totalorder %s77, %s78
    %p87 = scmp.eq.s32.totalorder %s18, 0
    %p88 = por %p86, %p87
    %p89 = scmp.ne.s32.totalorder %s77, %s78
    %p90 = scmp.eq.s32.totalorder %s19, 1
    %p91 = por %p89, %p90
    %p93 = scmp.ne.s32.totalorder %s78, %s92
    %p94 = scmp.eq.s32.totalorder %s19, 0
    %p95 = por %p93, %p94
    %s96 = sadd.s32 %s20, %s21
    %s97 = sadd.s32 %s32, %s28
    %s98 = ssub.s32 %s96, %s97
    %p99 = scmp.eq.s32.totalorder %s98, 0
    %s101 = sadd.s32 %s100, 1
    %s102 = scalar_select %p99, %s100, %s101
    %p105 = pneg %p99
    %p106 = scmp.eq.s32.totalorder %s13, 1
    %p107 = por %p105, %p106
    %p108 = scmp.ne.s32.totalorder %s100, %s103
    %p109 = scmp.eq.s32.totalorder %s13, 0
    %p110 = por %p108, %p109
    %p111 = scmp.ne.s32.totalorder %s100, %s103
    %p112 = scmp.eq.s32.totalorder %s18, 1
    %p113 = por %p111, %p112
    %p114 = scmp.ne.s32.totalorder %s103, %s104
    %p115 = scmp.eq.s32.totalorder %s18, 0
    %p116 = por %p114, %p115
    %p117 = scmp.ne.s32.totalorder %s103, %s104
    %p118 = scmp.eq.s32.totalorder %s19, 1
    %p119 = por %p117, %p118
    %p121 = scmp.ne.s32.totalorder %s104, %s120
    %p122 = scmp.eq.s32.totalorder %s19, 0
    %p123 = por %p121, %p122
    %s124 = sadd.s32 %s20, %s21
    %s125 = sadd.s32 %s32, %s28
    %s126 = ssub.s32 %s124, %s125
    %p127 = scmp.eq.s32.totalorder %s126, 0
    %s129 = sadd.s32 %s128, 1
    %s130 = scalar_select %p127, %s128, %s129
    %p133 = pneg %p127
    %p134 = scmp.eq.s32.totalorder %s13, 1
    %p135 = por %p133, %p134
    %p136 = scmp.ne.s32.totalorder %s128, %s131
    %p137 = scmp.eq.s32.totalorder %s13, 0
    %p138 = por %p136, %p137
    %p139 = scmp.ne.s32.totalorder %s128, %s131
    %p140 = scmp.eq.s32.totalorder %s18, 1
    %p141 = por %p139, %p140
    %p142 = scmp.ne.s32.totalorder %s131, %s132
    %p143 = scmp.eq.s32.totalorder %s18, 0
    %p144 = por %p142, %p143
    %p145 = scmp.ne.s32.totalorder %s131, %s132
    %p146 = scmp.eq.s32.totalorder %s19, 1
    %p147 = por %p145, %p146
    %p149 = scmp.ne.s32.totalorder %s132, %s148
    %p150 = scmp.eq.s32.totalorder %s19, 0
    %p151 = por %p149, %p150
    %s153 = sadd.s32 %s152, 1
    %p156 = scmp.eq.s32.totalorder %s13, 1
    %p157 = scmp.ne.s32.totalorder %s152, %s154
    %p158 = scmp.eq.s32.totalorder %s13, 0
    %p159 = por %p157, %p158
    %p160 = scmp.ne.s32.totalorder %s152, %s154
    %p161 = scmp.eq.s32.totalorder %s18, 1
    %p162 = por %p160, %p161
    %p163 = scmp.ne.s32.totalorder %s154, %s155
    %p164 = scmp.eq.s32.totalorder %s18, 0
    %p165 = por %p163, %p164
    %p166 = scmp.ne.s32.totalorder %s154, %s155
    %p167 = scmp.eq.s32.totalorder %s19, 1
    %p168 = por %p166, %p167
    %p170 = scmp.ne.s32.totalorder %s155, %s169
    %p171 = scmp.eq.s32.totalorder %s19, 0
    %p172 = por %p170, %p171
    %s173 = sadd.s32 %s20, %s21
    %s174 = sadd.s32 %s32, %s28
    %s175 = ssub.s32 %s173, %s174
    %p176 = scmp.eq.s32.totalorder %s175, 0
    %s178 = sadd.s32 %s177, 1
    %s179 = scalar_select %p176, %s177, %s178
    %p182 = pneg %p176
    %p183 = scmp.eq.s32.totalorder %s13, 1
    %p184 = por %p182, %p183
    %p185 = scmp.ne.s32.totalorder %s177, %s180
    %p186 = scmp.eq.s32.totalorder %s13, 0
    %p187 = por %p185, %p186
    %p188 = scmp.ne.s32.totalorder %s177, %s180
    %p189 = scmp.eq.s32.totalorder %s18, 1
    %p190 = por %p188, %p189
    %p191 = scmp.ne.s32.totalorder %s180, %s181
    %p192 = scmp.eq.s32.totalorder %s18, 0
    %p193 = por %p191, %p192
    %p194 = scmp.ne.s32.totalorder %s180, %s181
    %p195 = scmp.eq.s32.totalorder %s19, 1
    %p196 = por %p194, %p195
    %p198 = scmp.ne.s32.totalorder %s181, %s197
    %p199 = scmp.eq.s32.totalorder %s19, 0
    %p200 = por %p198, %p199
    %s201 = ssub.s32 %s20, %s32
    %p202 = scmp.eq.s32.totalorder %s201, 0
    %s204 = sadd.s32 %s203, 1
    %s205 = scalar_select %p202, %s203, %s204
    %p208 = pneg %p202
    %p209 = scmp.eq.s32.totalorder %s13, 1
    %p210 = por %p208, %p209
    %p211 = scmp.ne.s32.totalorder %s203, %s206
    %p212 = scmp.eq.s32.totalorder %s13, 0
    %p213 = por %p211, %p212
    %p214 = scmp.ne.s32.totalorder %s203, %s206
    %p215 = scmp.eq.s32.totalorder %s18, 1
    %p216 = por %p214, %p215
    %p217 = scmp.ne.s32.totalorder %s206, %s207
    %p218 = scmp.eq.s32.totalorder %s18, 0
    %p219 = por %p217, %p218
    %p220 = scmp.ne.s32.totalorder %s206, %s207
    %p221 = scmp.eq.s32.totalorder %s19, 1
    %p222 = por %p220, %p221
    %p224 = scmp.ne.s32.totalorder %s207, %s223
    %p225 = scmp.eq.s32.totalorder %s19, 0
    %p226 = por %p224, %p225
    %p227 = scmp.le.s32.totalorder 1, %s13
    %p228 = scmp.lt.s32.totalorder %s13, 3
    %p229 = pnand %p227, %p228
    %p230 = pneg %p229
    // Predicated region
    $region9: #{ppgn_layer_forward.1} parent=5 // pred_check
      _
    $region10: #{ppgn_layer_forward.1} parent=5 // pred_check_branch
      %232 = sbr.rel (%p229) target = $region12
    $region11: #{ppgn_layer_forward.1} parent=5 // pred_region
      %s233 = ssub.s32 %s13, 1
      // Predicated region
      $region13: #{ppgn_layer_forward.1} parent=11 // pred_check
        %p234 = pneg %p46
      $region14: #{ppgn_layer_forward.1} parent=11 // pred_check_branch
        %236 = sbr.rel (%p234) target = $region16
      $region15: #{ppgn_layer_forward.1} parent=11 // pred_region
        _
      $region16: #{ppgn_layer_forward.1} parent=11 // pred_fallthru
        _
      // Predicated region
      $region17: #{ppgn_layer_forward.1} parent=11 // pred_check
        %p237 = pneg %p67
      $region18: #{ppgn_layer_forward.1} parent=11 // pred_check_branch
        %239 = sbr.rel (%p237) target = $region20
      $region19: #{ppgn_layer_forward.1} parent=11 // pred_region
        _
      $region20: #{ppgn_layer_forward.1} parent=11 // pred_fallthru
        _
      // Predicated region
      $region21: #{ppgn_layer_forward.1} parent=11 // pred_check
        %p240 = pneg %p88
      $region22: #{ppgn_layer_forward.1} parent=11 // pred_check_branch
        %242 = sbr.rel (%p240) target = $region24
      $region23: #{ppgn_layer_forward.1} parent=11 // pred_region
        _
      $region24: #{ppgn_layer_forward.1} parent=11 // pred_fallthru
        _
      // Predicated region
      $region25: #{ppgn_layer_forward.1} parent=11 // pred_check
        %p243 = pneg %p165
      $region26: #{ppgn_layer_forward.1} parent=11 // pred_check_branch
        %245 = sbr.rel (%p243) target = $region28
      $region27: #{ppgn_layer_forward.1} parent=11 // pred_region
        _
      $region28: #{ppgn_layer_forward.1} parent=11 // pred_fallthru
        _
    $region12: #{ppgn_layer_forward.1} parent=5 // pred_fallthru
      _
    %p246 = scmp.lt.s32.totalorder %s13, 2
    // Predicated region
    $region29: #{ppgn_layer_forward.1} parent=5 // pred_check
      %p247 = pneg %p246
    $region30: #{ppgn_layer_forward.1} parent=5 // pred_check_branch
      %249 = sbr.rel (%p247) target = $region32
    $region31: #{ppgn_layer_forward.1} parent=5 // pred_region
      // Predicated region
      $region33: #{ppgn_layer_forward.1} parent=31 // pred_check
        %p250 = pneg %p110
      $region34: #{ppgn_layer_forward.1} parent=31 // pred_check_branch
        %252 = sbr.rel (%p250) target = $region36
      $region35: #{ppgn_layer_forward.1} parent=31 // pred_region
        %s253 = sadd.s32 %s20, %s21
        %p254 = scmp.lt.s32.totalorder %s253, 1
        %s255 = scalar_select %p254, %s253, 1
        %s256 = smul.addr %s255, 8
        %s257 = scalar_lea.vmem %s3, %s256
        %s258 = sadd.s32 %s20, %s21
      $region36: #{ppgn_layer_forward.1} parent=31 // pred_fallthru
        _
      // Predicated region
      $region37: #{ppgn_layer_forward.1} parent=31 // pred_check
        %p259 = pneg %p138
      $region38: #{ppgn_layer_forward.1} parent=31 // pred_check_branch
        %261 = sbr.rel (%p259) target = $region40
      $region39: #{ppgn_layer_forward.1} parent=31 // pred_region
        %s262 = sadd.s32 %s20, %s21
        %p263 = scmp.lt.s32.totalorder %s262, 1
        %s264 = scalar_select %p263, %s262, 1
        %s265 = smul.addr %s264, 8
        %s266 = scalar_lea.vmem %s4, %s265
        %s267 = sadd.s32 %s20, %s21
      $region40: #{ppgn_layer_forward.1} parent=31 // pred_fallthru
        _
      // Predicated region
      $region41: #{ppgn_layer_forward.1} parent=31 // pred_check
        %p268 = pneg %p187
      $region42: #{ppgn_layer_forward.1} parent=31 // pred_check_branch
        %270 = sbr.rel (%p268) target = $region44
      $region43: #{ppgn_layer_forward.1} parent=31 // pred_region
        %s271 = sadd.s32 %s20, %s21
        %p272 = scmp.lt.s32.totalorder %s271, 1
        %s273 = scalar_select %p272, %s271, 1
        %s274 = smul.addr %s273, 8
        %s275 = scalar_lea.vmem %s6, %s274
        %s276 = sadd.s32 %s20, %s21
      $region44: #{ppgn_layer_forward.1} parent=31 // pred_fallthru
        _
    $region32: #{ppgn_layer_forward.1} parent=5 // pred_fallthru
      _
    %p277 = scmp.le.s32.totalorder 1, %s13
    %p278 = scmp.lt.s32.totalorder %s13, 3
    %p279 = pnand %p277, %p278
    %p280 = pneg %p279
    // Predicated region
    $region45: #{ppgn_layer_forward.1} parent=5 // pred_check
      _
    $region46: #{ppgn_layer_forward.1} parent=5 // pred_check_branch
      %282 = sbr.rel (%p279) target = $region48
    $region47: #{ppgn_layer_forward.1} parent=5 // pred_region
      %s283 = ssub.s32 %s13, 1
      %p284 = pneg %p46
      %p285 = pneg %p43
      %p286 = pneg %p67
      %p287 = pneg %p64
      %p288 = pneg %p88
      %p289 = pneg %p85
      %s290 = sadd.s32 %s22, %s23
      %p291 = scmp.lt.s32.totalorder %s290, 1
      %s292 = scalar_select %p291, %s290, 1
      %s293 = smul.addr %s292, 8
      %s294 = scalar_lea.vmem %s3, %s293
      %p295 = pneg %p116
      %p296 = pneg %p113
      %s297 = sadd.s32 %s22, %s23
      %p298 = scmp.lt.s32.totalorder %s297, 1
      %s299 = scalar_select %p298, %s297, 1
      %s300 = smul.addr %s299, 8
      %s301 = scalar_lea.vmem %s4, %s300
      %p302 = pneg %p144
      %p303 = pneg %p141
      %p304 = pneg %p165
      %p305 = pneg %p162
      %s306 = sadd.s32 %s22, %s23
      %p307 = scmp.lt.s32.totalorder %s306, 1
      %s308 = scalar_select %p307, %s306, 1
      %s309 = smul.addr %s308, 8
      %s310 = scalar_lea.vmem %s6, %s309
      %p311 = pneg %p193
      %p312 = pneg %p190
      %p313 = pneg %p219
      %p314 = pneg %p216
      %s315 = smul.u32 3, %s22
      %p316 = scmp.lt.s32.totalorder %s315, 5
      %s317 = scalar_select %p316, %s315, 5
      %s318 = smul.addr %s317, 2
      %s319 = smul.addr %s318, 8
      %s320 = scalar_lea.vmem %s7, %s319
      %s321 = sadd.s32 %s22, %s23
      %p322 = scmp.lt.s32.totalorder %s321, 1
      %s323 = scalar_select %p322, %s321, 1
      %s324 = smul.addr %s323, 8
      %s325 = scalar_lea.vmem %s3, %s324
      %s326 = sadd.s32 %s22, %s23
      %s327 = sadd.s32 %s22, %s23
      %p328 = scmp.lt.s32.totalorder %s327, 1
      %s329 = scalar_select %p328, %s327, 1
      %s330 = smul.addr %s329, 8
      %s331 = scalar_lea.vmem %s4, %s330
      %s332 = sadd.s32 %s22, %s23
      %s333 = sadd.s32 %s22, %s23
      %p334 = scmp.lt.s32.totalorder %s333, 1
      %s335 = scalar_select %p334, %s333, 1
      %s336 = smul.addr %s335, 8
      %s337 = scalar_lea.vmem %s6, %s336
      %s338 = sadd.s32 %s22, %s23
      %s339 = smul.u32 3, %s22
      %p340 = scmp.lt.s32.totalorder %s339, 5
      %s341 = scalar_select %p340, %s339, 5
      %s342 = smul.addr %s341, 2
      %s343 = smul.addr %s342, 8
      %s344 = scalar_lea.vmem %s7, %s343
      %s345 = smul.u32 3, %s22
      %p346 = scmp.eq.s32.totalorder %s23, 0
      // Predicated region
      $region49: #{ppgn_layer_forward.1} parent=47 // pred_check
        %p347 = pneg %p346
      $region50: #{ppgn_layer_forward.1} parent=47 // pred_check_branch
        %349 = sbr.rel (%p347) target = $region52
      $region51: #{ppgn_layer_forward.1} parent=47 // pred_region
        %v350 = vlaneseq
        %v351 = vshrl.u32 %v350, 7
        %v352 = vadd.s32 %v351, 8
        %v353 = vld [vmem:[%s0] sm:$0x3]
        %v354 = vlaneseq
        %v355 = vshrl.u32 %v354, 7
        %v356 = vsub.s32 0, %v355
        %v357 = vrot.slane %v353, %v356
        %v358 = vlaneseq
        %v359 = vshrl.u32 %v358, 7
        %v360 = vsub.s32 1, %v359
        %v361 = vrot.slane %v353, %v360
        %vm362 = vcmp.eq.s32.totalorder %v351, %v357
        %vm363 = vcmp.eq.s32.totalorder %v351, %v361
        %vm364 = vcmp.eq.s32.totalorder %v352, %v357
        %vm365 = vcmp.eq.s32.totalorder %v352, %v361
        %v366 = vsel %vm362, 1, 0
        %v367 = vsel %vm363, 1, 0
        %v368 = vsel %vm364, 1, 0
        %v369 = vsel %vm365, 1, 0
        %v370 = vcvt.s32.f32 %v366
        %v371 = vcvt.s32.f32 %v367
        %v372 = vcvt.s32.f32 %v368
        %v373 = vcvt.s32.f32 %v369
        %374 = vst [vmem:[#allocation2] sm:$0xff] %v370
        %375 = vst [vmem:[#allocation2 + $0x8] sm:$0xff] %v371
        %376 = vst [vmem:[#allocation2 + $0x10] sm:$0xff] %v372
        %377 = vst [vmem:[#allocation2 + $0x18] sm:$0xff] %v373
        %v378 = vld [vmem:[%s1] sm:$0x3]
        %v379 = vlaneseq
        %v380 = vshrl.u32 %v379, 7
        %v381 = vsub.s32 0, %v380
        %v382 = vrot.slane %v378, %v381
        %v383 = vlaneseq
        %v384 = vshrl.u32 %v383, 7
        %v385 = vsub.s32 1, %v384
        %v386 = vrot.slane %v378, %v385
        %vm387 = vcmp.eq.s32.totalorder %v351, %v382
        %vm388 = vcmp.eq.s32.totalorder %v351, %v386
        %vm389 = vcmp.eq.s32.totalorder %v352, %v382
        %vm390 = vcmp.eq.s32.totalorder %v352, %v386
        %v391 = vsel %vm387, 1, 0
        %v392 = vsel %vm388, 1, 0
        %v393 = vsel %vm389, 1, 0
        %v394 = vsel %vm390, 1, 0
        %v395 = vcvt.s32.f32 %v391
        %v396 = vcvt.s32.f32 %v392
        %v397 = vcvt.s32.f32 %v393
        %v398 = vcvt.s32.f32 %v394
        %399 = vst [vmem:[#allocation3] sm:$0xff] %v395
        %400 = vst [vmem:[#allocation3 + $0x8] sm:$0xff] %v396
        %401 = vst [vmem:[#allocation3 + $0x10] sm:$0xff] %v397
        %402 = vst [vmem:[#allocation3 + $0x18] sm:$0xff] %v398
        %v403 = vld [vmem:[%s5] sm:$0xff]
        %v404 = vld [vmem:[%s5 + $0x8] sm:$0xff]
        %v405 = vld [vmem:[%s5 + $0x10] sm:$0xff]
        %v406 = vld [vmem:[%s2] sm:$0xff]
        %v407 = vld [vmem:[%s2 + $0x8] sm:$0xff]
        %v408 = vld [vmem:[%s2 + $0x10] sm:$0xff]
        %v409 = vld [vmem:[%s2 + $0x18] sm:$0xff]
        %vm410 = vcmask 130048
        %v412 = vsel %vm410, %v403, 0
        %v415 = vsel %vm410, %v404, 0
        %v418 = vsel %vm410, %v405, 0
        %420 = vmatprep.subr.mxu0 %v407
        %421 = vmatpush1.msra.mxu0 %v406
        %422 = vmatprep.subr.mxu0 %v409
        %423 = vmatpush1.msra.mxu0 %v408
        %424 = vmatprep.subr.mxu0 0.0
        %425 = vmatpush1.msra.mxu0 0.0
        %426 = vmatprep.subr.mxu0 0.0
        %427 = vmatpush1.msra.mxu0 0.0
        %428 = vmatprep.subr.mxu0 0.0
        %429 = vmatpush1.msra.mxu0 0.0
        %430 = vmatprep.subr.mxu0 0.0
        %431 = vmatpush1.msra.mxu0 0.0
        %432 = vmatprep.subr.mxu0 0.0
        %433 = vmatpush1.msra.mxu0 0.0
        %434 = vmatprep.subr.mxu0 0.0
        %435 = vmatpush1.msra.mxu0 0.0
        %436 = vmatprep.subr.mxu0 0.0
        %437 = vmatpush1.msra.mxu0 0.0
        %438 = vmatprep.subr.mxu0 0.0
        %439 = vmatpush1.msra.mxu0 0.0
        %440 = vmatprep.subr.mxu0 0.0
        %441 = vmatpush1.msra.mxu0 0.0
        %442 = vmatprep.subr.mxu0 0.0
        %443 = vmatpush1.msra.mxu0 0.0
        %444 = vmatprep.subr.mxu0 0.0
        %445 = vmatpush1.msra.mxu0 0.0
        %446 = vmatprep.subr.mxu0 0.0
        %447 = vmatpush1.msra.mxu0 0.0
        %448 = vmatprep.subr.mxu0 0.0
        %449 = vmatpush1.msra.mxu0 0.0
        %450 = vmatprep.subr.mxu0 0.0
        %451 = vmatpush1.msra.mxu0 0.0
        %452 = vmatprep.subr.mxu0 0.0
        %453 = vmatpush1.msra.mxu0 0.0
        %454 = vmatprep.subr.mxu0 0.0
        %455 = vmatpush1.msra.mxu0 0.0
        %456 = vmatprep.subr.mxu0 0.0
        %457 = vmatpush1.msra.mxu0 0.0
        %458 = vmatprep.subr.mxu0 0.0
        %459 = vmatpush1.msra.mxu0 0.0
        %460 = vmatprep.subr.mxu0 0.0
        %461 = vmatpush1.msra.mxu0 0.0
        %462 = vmatprep.subr.mxu0 0.0
        %463 = vmatpush1.msra.mxu0 0.0
        %464 = vmatprep.subr.mxu0 0.0
        %465 = vmatpush1.msra.mxu0 0.0
        %466 = vmatprep.subr.mxu0 0.0
        %467 = vmatpush1.msra.mxu0 0.0
        %468 = vmatprep.subr.mxu0 0.0
        %469 = vmatpush1.msra.mxu0 0.0
        %470 = vmatprep.subr.mxu0 0.0
        %471 = vmatpush1.msra.mxu0 0.0
        %472 = vmatprep.subr.mxu0 0.0
        %473 = vmatpush1.msra.mxu0 0.0
        %474 = vmatprep.subr.mxu0 0.0
        %475 = vmatpush1.msra.mxu0 0.0
        %476 = vmatprep.subr.mxu0 0.0
        %477 = vmatpush1.msra.mxu0 0.0
        %478 = vmatprep.subr.mxu0 0.0
        %479 = vmatpush1.msra.mxu0 0.0
        %480 = vmatprep.subr.mxu0 0.0
        %481 = vmatpush1.msra.mxu0 0.0
        %482 = vmatprep.subr.mxu0 0.0
        %483 = vmatpush1.msra.mxu0 0.0
        %484 = vmatprep.mubr.f32.mxu0 0.0
        %485 = vmatmul.mubr.f32.gmra.mrb[0].mxu0 %v412
        %v486 = vpop.f32.mrb[0].mxu0
        %v487 = vadd.f32 0.0, %v486
        %v488 = vpop.f32.mrb[0].mxu0
        %v489 = vadd.f32 0.0, %v488
        %490 = vmatprep.mubr.f32.mxu0 0.0
        %491 = vmatmul.mubr.f32.gmra.mrb[0].mxu0 %v415
        %v492 = vpop.f32.mrb[0].mxu0
        %v493 = vadd.f32 0.0, %v492
        %v494 = vpop.f32.mrb[0].mxu0
        %v495 = vadd.f32 0.0, %v494
        %496 = vmatprep.mubr.f32.mxu0 0.0
        %497 = vmatmul.mubr.f32.gmra.mrb[0].mxu0 %v418
        %v498 = vpop.f32.mrb[0].mxu0
        %v499 = vadd.f32 0.0, %v498
        %v500 = vpop.f32.mrb[0].mxu0
        %v501 = vadd.f32 0.0, %v500
        %502 = vdwg.mxu0
        %p503 = scmp.eq.s32.totalorder %s22, 0
        %s504 = scalar_select %p503, 1, 0
        %s505 = scvt.s32.f32 %s504
        %v506 = vstv %s505
        %v507 = vmul.f32 %v487, %v506
        %v508 = vmul.f32 %v489, %v506
        %v509 = vmul.f32 %v493, %v506
        %v510 = vmul.f32 %v495, %v506
        %v511 = vmul.f32 %v499, %v506
        %v512 = vmul.f32 %v501, %v506
        %513 = vst [vmem:[%s344] sm:$0xff] %v507
        %514 = vst [vmem:[%s344 + $0x8] sm:$0xff] %v508
        %515 = vst [vmem:[%s344 + $0x10] sm:$0xff] %v509
        %516 = vst [vmem:[%s344 + $0x18] sm:$0xff] %v510
        %517 = vst [vmem:[%s344 + $0x20] sm:$0xff] %v511
        %518 = vst [vmem:[%s344 + $0x28] sm:$0xff] %v512
      $region52: #{ppgn_layer_forward.1} parent=47 // pred_fallthru
        _
      %v519 = vld [vmem:[#allocation2] sm:$0xff]
      %v520 = vld [vmem:[#allocation2 + $0x8] sm:$0xff]
      %v521 = vld [vmem:[#allocation2 + $0x10] sm:$0xff]
      %v522 = vld [vmem:[#allocation2 + $0x18] sm:$0xff]
      %v523 = vld [vmem:[#allocation3] sm:$0xff]
      %v524 = vld [vmem:[#allocation3 + $0x8] sm:$0xff]
      %v525 = vld [vmem:[#allocation3 + $0x10] sm:$0xff]
      %v526 = vld [vmem:[#allocation3 + $0x18] sm:$0xff]
      %v527 = vld [vmem:[%s2] sm:$0xff]
      %v528 = vld [vmem:[%s2 + $0x8] sm:$0xff]
      %v529 = vld [vmem:[%s2 + $0x10] sm:$0xff]
      %v530 = vld [vmem:[%s2 + $0x18] sm:$0xff]
      %v531 = vld [vmem:[%s325] sm:$0xff]
      %vm532 = vcmask 130048
      %v534 = vsel %vm532, %v531, 0
      %536 = vmatprep.subr.mxu0 %v528
      %537 = vmatpush1.msra.mxu0 %v527
      %538 = vmatprep.subr.mxu0 %v530
      %539 = vmatpush1.msra.mxu0 %v529
      %540 = vmatprep.subr.mxu0 0.0
      %541 = vmatpush1.msra.mxu0 0.0
      %542 = vmatprep.subr.mxu0 0.0
      %543 = vmatpush1.msra.mxu0 0.0
      %544 = vmatprep.subr.mxu0 0.0
      %545 = vmatpush1.msra.mxu0 0.0
      %546 = vmatprep.subr.mxu0 0.0
      %547 = vmatpush1.msra.mxu0 0.0
      %548 = vmatprep.subr.mxu0 0.0
      %549 = vmatpush1.msra.mxu0 0.0
      %550 = vmatprep.subr.mxu0 0.0
      %551 = vmatpush1.msra.mxu0 0.0
      %552 = vmatprep.subr.mxu0 0.0
      %553 = vmatpush1.msra.mxu0 0.0
      %554 = vmatprep.subr.mxu0 0.0
      %555 = vmatpush1.msra.mxu0 0.0
      %556 = vmatprep.subr.mxu0 0.0
      %557 = vmatpush1.msra.mxu0 0.0
      %558 = vmatprep.subr.mxu0 0.0
      %559 = vmatpush1.msra.mxu0 0.0
      %560 = vmatprep.subr.mxu0 0.0
      %561 = vmatpush1.msra.mxu0 0.0
      %562 = vmatprep.subr.mxu0 0.0
      %563 = vmatpush1.msra.mxu0 0.0
      %564 = vmatprep.subr.mxu0 0.0
      %565 = vmatpush1.msra.mxu0 0.0
      %566 = vmatprep.subr.mxu0 0.0
      %567 = vmatpush1.msra.mxu0 0.0
      %568 = vmatprep.subr.mxu0 0.0
      %569 = vmatpush1.msra.mxu0 0.0
      %570 = vmatprep.subr.mxu0 0.0
      %571 = vmatpush1.msra.mxu0 0.0
      %572 = vmatprep.subr.mxu0 0.0
      %573 = vmatpush1.msra.mxu0 0.0
      %574 = vmatprep.subr.mxu0 0.0
      %575 = vmatpush1.msra.mxu0 0.0
      %576 = vmatprep.subr.mxu0 0.0
      %577 = vmatpush1.msra.mxu0 0.0
      %578 = vmatprep.subr.mxu0 0.0
      %579 = vmatpush1.msra.mxu0 0.0
      %580 = vmatprep.subr.mxu0 0.0
      %581 = vmatpush1.msra.mxu0 0.0
      %582 = vmatprep.subr.mxu0 0.0
      %583 = vmatpush1.msra.mxu0 0.0
      %584 = vmatprep.subr.mxu0 0.0
      %585 = vmatpush1.msra.mxu0 0.0
      %586 = vmatprep.subr.mxu0 0.0
      %587 = vmatpush1.msra.mxu0 0.0
      %588 = vmatprep.subr.mxu0 0.0
      %589 = vmatpush1.msra.mxu0 0.0
      %590 = vmatprep.subr.mxu0 0.0
      %591 = vmatpush1.msra.mxu0 0.0
      %592 = vmatprep.subr.mxu0 0.0
      %593 = vmatpush1.msra.mxu0 0.0
      %594 = vmatprep.subr.mxu0 0.0
      %595 = vmatpush1.msra.mxu0 0.0
      %596 = vmatprep.subr.mxu0 0.0
      %597 = vmatpush1.msra.mxu0 0.0
      %598 = vmatprep.subr.mxu0 0.0
      %599 = vmatpush1.msra.mxu0 0.0
      %600 = vmatprep.mubr.f32.mxu0 0.0
      %601 = vmatmul.mubr.f32.gmra.mrb[0].mxu0 %v534
      %v602 = vpop.f32.mrb[0].mxu0
      %v603 = vadd.f32 0.0, %v602
      %v604 = vpop.f32.mrb[0].mxu0
      %v605 = vadd.f32 0.0, %v604
      %606 = vdwg.mxu0
      %v607 = vld [vmem:[%s331] sm:$0xff]
      %v609 = vsel %vm532, %v607, 0
      %611 = vmatprep.subr.mxu0 %v528
      %612 = vmatpush1.msra.mxu0 %v527
      %613 = vmatprep.subr.mxu0 %v530
      %614 = vmatpush1.msra.mxu0 %v529
      %615 = vmatprep.subr.mxu0 0.0
      %616 = vmatpush1.msra.mxu0 0.0
      %617 = vmatprep.subr.mxu0 0.0
      %618 = vmatpush1.msra.mxu0 0.0
      %619 = vmatprep.subr.mxu0 0.0
      %620 = vmatpush1.msra.mxu0 0.0
      %621 = vmatprep.subr.mxu0 0.0
      %622 = vmatpush1.msra.mxu0 0.0
      %623 = vmatprep.subr.mxu0 0.0
      %624 = vmatpush1.msra.mxu0 0.0
      %625 = vmatprep.subr.mxu0 0.0
      %626 = vmatpush1.msra.mxu0 0.0
      %627 = vmatprep.subr.mxu0 0.0
      %628 = vmatpush1.msra.mxu0 0.0
      %629 = vmatprep.subr.mxu0 0.0
      %630 = vmatpush1.msra.mxu0 0.0
      %631 = vmatprep.subr.mxu0 0.0
      %632 = vmatpush1.msra.mxu0 0.0
      %633 = vmatprep.subr.mxu0 0.0
      %634 = vmatpush1.msra.mxu0 0.0
      %635 = vmatprep.subr.mxu0 0.0
      %636 = vmatpush1.msra.mxu0 0.0
      %637 = vmatprep.subr.mxu0 0.0
      %638 = vmatpush1.msra.mxu0 0.0
      %639 = vmatprep.subr.mxu0 0.0
      %640 = vmatpush1.msra.mxu0 0.0
      %641 = vmatprep.subr.mxu0 0.0
      %642 = vmatpush1.msra.mxu0 0.0
      %643 = vmatprep.subr.mxu0 0.0
      %644 = vmatpush1.msra.mxu0 0.0
      %645 = vmatprep.subr.mxu0 0.0
      %646 = vmatpush1.msra.mxu0 0.0
      %647 = vmatprep.subr.mxu0 0.0
      %648 = vmatpush1.msra.mxu0 0.0
      %649 = vmatprep.subr.mxu0 0.0
      %650 = vmatpush1.msra.mxu0 0.0
      %651 = vmatprep.subr.mxu0 0.0
      %652 = vmatpush1.msra.mxu0 0.0
      %653 = vmatprep.subr.mxu0 0.0
      %654 = vmatpush1.msra.mxu0 0.0
      %655 = vmatprep.subr.mxu0 0.0
      %656 = vmatpush1.msra.mxu0 0.0
      %657 = vmatprep.subr.mxu0 0.0
      %658 = vmatpush1.msra.mxu0 0.0
      %659 = vmatprep.subr.mxu0 0.0
      %660 = vmatpush1.msra.mxu0 0.0
      %661 = vmatprep.subr.mxu0 0.0
      %662 = vmatpush1.msra.mxu0 0.0
      %663 = vmatprep.subr.mxu0 0.0
      %664 = vmatpush1.msra.mxu0 0.0
      %665 = vmatprep.subr.mxu0 0.0
      %666 = vmatpush1.msra.mxu0 0.0
      %667 = vmatprep.subr.mxu0 0.0
      %668 = vmatpush1.msra.mxu0 0.0
      %669 = vmatprep.subr.mxu0 0.0
      %670 = vmatpush1.msra.mxu0 0.0
      %671 = vmatprep.subr.mxu0 0.0
      %672 = vmatpush1.msra.mxu0 0.0
      %673 = vmatprep.subr.mxu0 0.0
      %674 = vmatpush1.msra.mxu0 0.0
      %675 = vmatprep.mubr.f32.mxu0 0.0
      %676 = vmatmul.mubr.f32.gmra.mrb[0].mxu0 %v609
      %v677 = vpop.f32.mrb[0].mxu0
      %v678 = vadd.f32 0.0, %v677
      %v679 = vpop.f32.mrb[0].mxu0
      %v680 = vadd.f32 0.0, %v679
      %681 = vdwg.mxu0
      %v684 = vcombine.low %v603, %v605
      %v685 = vcombine.high %v603, %v605
      %v687 = vunpack.c.l.s4 1966171168
      %v688 = vunpack.c.0.s8 %v687
      %v689 = vlaneseq
      %v690 = vshrl.u32 %v689, 7
      %v691 = vsub.s32 %v688, %v690
      %v692 = vrot.slane %v684, %v691
      %v694 = vunpack.c.l.s4 1966171168
      %v695 = vunpack.c.0.s8 %v694
      %v696 = vlaneseq
      %v697 = vshrl.u32 %v696, 7
      %v698 = vsub.s32 %v695, %v697
      %v699 = vrot.slane %v685, %v698
      %v700 = vcombine.high %v692, %v692
      %v701 = vcombine.high %v699, %v699
      %v703 = vunpack.c.l.s4 1966171168
      %v704 = vunpack.c.0.s8 %v703
      %v705 = vlaneseq
      %v706 = vshrl.u32 %v705, 7
      %v707 = vsub.s32 %v704, %v706
      %v708 = vrot.slane %v692, %v707
      %v710 = vunpack.c.l.s4 1966171168
      %v711 = vunpack.c.0.s8 %v710
      %v712 = vlaneseq
      %v713 = vshrl.u32 %v712, 7
      %v714 = vsub.s32 %v711, %v713
      %v715 = vrot.slane %v699, %v714
      %v717 = vunpack.c.l.s4 1966171168
      %v718 = vunpack.c.0.s8 %v717
      %v719 = vlaneseq
      %v720 = vshrl.u32 %v719, 7
      %v721 = vsub.s32 %v718, %v720
      %v722 = vrot.slane %v700, %v721
      %v724 = vunpack.c.l.s4 1966171168
      %v725 = vunpack.c.0.s8 %v724
      %v726 = vlaneseq
      %v727 = vshrl.u32 %v726, 7
      %v728 = vsub.s32 %v725, %v727
      %v729 = vrot.slane %v701, %v728
      %v730 = vcombine.high %v708, %v708
      %v731 = vcombine.high %v715, %v715
      %v732 = vcombine.high %v722, %v722
      %v733 = vcombine.high %v729, %v729
      %v734 = vlaneseq
      %v735 = vshrl.u32 %v734, 7
      %v736 = vsub.s32 0, %v735
      %v737 = vrot.slane %v708, %v736
      %v738 = vlaneseq
      %v739 = vshrl.u32 %v738, 7
      %v740 = vsub.s32 1, %v739
      %v741 = vrot.slane %v708, %v740
      %v742 = vlaneseq
      %v743 = vshrl.u32 %v742, 7
      %v744 = vsub.s32 0, %v743
      %v745 = vrot.slane %v722, %v744
      %v746 = vlaneseq
      %v747 = vshrl.u32 %v746, 7
      %v748 = vsub.s32 1, %v747
      %v749 = vrot.slane %v722, %v748
      %v750 = vlaneseq
      %v751 = vshrl.u32 %v750, 7
      %v752 = vsub.s32 0, %v751
      %v753 = vrot.slane %v730, %v752
      %v754 = vlaneseq
      %v755 = vshrl.u32 %v754, 7
      %v756 = vsub.s32 1, %v755
      %v757 = vrot.slane %v730, %v756
      %v758 = vlaneseq
      %v759 = vshrl.u32 %v758, 7
      %v760 = vsub.s32 0, %v759
      %v761 = vrot.slane %v732, %v760
      %v762 = vlaneseq
      %v763 = vshrl.u32 %v762, 7
      %v764 = vsub.s32 1, %v763
      %v765 = vrot.slane %v732, %v764
      %v766 = vlaneseq
      %v767 = vshrl.u32 %v766, 7
      %v768 = vsub.s32 0, %v767
      %v769 = vrot.slane %v715, %v768
      %v770 = vlaneseq
      %v771 = vshrl.u32 %v770, 7
      %v772 = vsub.s32 1, %v771
      %v773 = vrot.slane %v715, %v772
      %v774 = vlaneseq
      %v775 = vshrl.u32 %v774, 7
      %v776 = vsub.s32 0, %v775
      %v777 = vrot.slane %v729, %v776
      %v778 = vlaneseq
      %v779 = vshrl.u32 %v778, 7
      %v780 = vsub.s32 1, %v779
      %v781 = vrot.slane %v729, %v780
      %v782 = vlaneseq
      %v783 = vshrl.u32 %v782, 7
      %v784 = vsub.s32 0, %v783
      %v785 = vrot.slane %v731, %v784
      %v786 = vlaneseq
      %v787 = vshrl.u32 %v786, 7
      %v788 = vsub.s32 1, %v787
      %v789 = vrot.slane %v731, %v788
      %v790 = vlaneseq
      %v791 = vshrl.u32 %v790, 7
      %v792 = vsub.s32 0, %v791
      %v793 = vrot.slane %v733, %v792
      %v794 = vlaneseq
      %v795 = vshrl.u32 %v794, 7
      %v796 = vsub.s32 1, %v795
      %v797 = vrot.slane %v733, %v796
      %v814 = vmul.f32 %v737, %v519
      %v815 = vmul.f32 %v741, %v520
      %v816 = vmul.f32 %v737, %v521
      %v817 = vmul.f32 %v741, %v522
      %v818 = vmul.f32 %v745, %v519
      %v819 = vmul.f32 %v749, %v520
      %v820 = vmul.f32 %v745, %v521
      %v821 = vmul.f32 %v749, %v522
      %v822 = vmul.f32 %v753, %v519
      %v823 = vmul.f32 %v757, %v520
      %v824 = vmul.f32 %v753, %v521
      %v825 = vmul.f32 %v757, %v522
      %v826 = vmul.f32 %v761, %v519
      %v827 = vmul.f32 %v765, %v520
      %v828 = vmul.f32 %v761, %v521
      %v829 = vmul.f32 %v765, %v522
      %v830 = vmul.f32 %v769, %v519
      %v831 = vmul.f32 %v773, %v520
      %v832 = vmul.f32 %v769, %v521
      %v833 = vmul.f32 %v773, %v522
      %v834 = vmul.f32 %v777, %v519
      %v835 = vmul.f32 %v781, %v520
      %v836 = vmul.f32 %v777, %v521
      %v837 = vmul.f32 %v781, %v522
      %v838 = vmul.f32 %v785, %v519
      %v839 = vmul.f32 %v789, %v520
      %v840 = vmul.f32 %v785, %v521
      %v841 = vmul.f32 %v789, %v522
      %v842 = vmul.f32 %v793, %v519
      %v843 = vmul.f32 %v797, %v520
      %v844 = vmul.f32 %v793, %v521
      %v845 = vmul.f32 %v797, %v522
      %v848 = vcombine.low %v678, %v680
      %v849 = vcombine.high %v678, %v680
      %v851 = vunpack.c.l.s4 1966171168
      %v852 = vunpack.c.0.s8 %v851
      %v853 = vlaneseq
      %v854 = vshrl.u32 %v853, 7
      %v855 = vsub.s32 %v852, %v854
      %v856 = vrot.slane %v848, %v855
      %v858 = vunpack.c.l.s4 1966171168
      %v859 = vunpack.c.0.s8 %v858
      %v860 = vlaneseq
      %v861 = vshrl.u32 %v860, 7
      %v862 = vsub.s32 %v859, %v861
      %v863 = vrot.slane %v849, %v862
      %v864 = vcombine.high %v856, %v856
      %v865 = vcombine.high %v863, %v863
      %v867 = vunpack.c.l.s4 1966171168
      %v868 = vunpack.c.0.s8 %v867
      %v869 = vlaneseq
      %v870 = vshrl.u32 %v869, 7
      %v871 = vsub.s32 %v868, %v870
      %v872 = vrot.slane %v856, %v871
      %v874 = vunpack.c.l.s4 1966171168
      %v875 = vunpack.c.0.s8 %v874
      %v876 = vlaneseq
      %v877 = vshrl.u32 %v876, 7
      %v878 = vsub.s32 %v875, %v877
      %v879 = vrot.slane %v863, %v878
      %v881 = vunpack.c.l.s4 1966171168
      %v882 = vunpack.c.0.s8 %v881
      %v883 = vlaneseq
      %v884 = vshrl.u32 %v883, 7
      %v885 = vsub.s32 %v882, %v884
      %v886 = vrot.slane %v864, %v885
      %v888 = vunpack.c.l.s4 1966171168
      %v889 = vunpack.c.0.s8 %v888
      %v890 = vlaneseq
      %v891 = vshrl.u32 %v890, 7
      %v892 = vsub.s32 %v889, %v891
      %v893 = vrot.slane %v865, %v892
      %v894 = vcombine.high %v872, %v872
      %v895 = vcombine.high %v879, %v879
      %v896 = vcombine.high %v886, %v886
      %v897 = vcombine.high %v893, %v893
      %v898 = vlaneseq
      %v899 = vshrl.u32 %v898, 7
      %v900 = vsub.s32 0, %v899
      %v901 = vrot.slane %v872, %v900
      %v902 = vlaneseq
      %v903 = vshrl.u32 %v902, 7
      %v904 = vsub.s32 1, %v903
      %v905 = vrot.slane %v872, %v904
      %v906 = vlaneseq
      %v907 = vshrl.u32 %v906, 7
      %v908 = vsub.s32 0, %v907
      %v909 = vrot.slane %v886, %v908
      %v910 = vlaneseq
      %v911 = vshrl.u32 %v910, 7
      %v912 = vsub.s32 1, %v911
      %v913 = vrot.slane %v886, %v912
      %v914 = vlaneseq
      %v915 = vshrl.u32 %v914, 7
      %v916 = vsub.s32 0, %v915
      %v917 = vrot.slane %v894, %v916
      %v918 = vlaneseq
      %v919 = vshrl.u32 %v918, 7
      %v920 = vsub.s32 1, %v919
      %v921 = vrot.slane %v894, %v920
      %v922 = vlaneseq
      %v923 = vshrl.u32 %v922, 7
      %v924 = vsub.s32 0, %v923
      %v925 = vrot.slane %v896, %v924
      %v926 = vlaneseq
      %v927 = vshrl.u32 %v926, 7
      %v928 = vsub.s32 1, %v927
      %v929 = vrot.slane %v896, %v928
      %v930 = vlaneseq
      %v931 = vshrl.u32 %v930, 7
      %v932 = vsub.s32 0, %v931
      %v933 = vrot.slane %v879, %v932
      %v934 = vlaneseq
      %v935 = vshrl.u32 %v934, 7
      %v936 = vsub.s32 1, %v935
      %v937 = vrot.slane %v879, %v936
      %v938 = vlaneseq
      %v939 = vshrl.u32 %v938, 7
      %v940 = vsub.s32 0, %v939
      %v941 = vrot.slane %v893, %v940
      %v942 = vlaneseq
      %v943 = vshrl.u32 %v942, 7
      %v944 = vsub.s32 1, %v943
      %v945 = vrot.slane %v893, %v944
      %v946 = vlaneseq
      %v947 = vshrl.u32 %v946, 7
      %v948 = vsub.s32 0, %v947
      %v949 = vrot.slane %v895, %v948
      %v950 = vlaneseq
      %v951 = vshrl.u32 %v950, 7
      %v952 = vsub.s32 1, %v951
      %v953 = vrot.slane %v895, %v952
      %v954 = vlaneseq
      %v955 = vshrl.u32 %v954, 7
      %v956 = vsub.s32 0, %v955
      %v957 = vrot.slane %v897, %v956
      %v958 = vlaneseq
      %v959 = vshrl.u32 %v958, 7
      %v960 = vsub.s32 1, %v959
      %v961 = vrot.slane %v897, %v960
      %v978 = vmul.f32 %v901, %v519
      %v979 = vmul.f32 %v905, %v520
      %v980 = vmul.f32 %v901, %v521
      %v981 = vmul.f32 %v905, %v522
      %v982 = vmul.f32 %v909, %v519
      %v983 = vmul.f32 %v913, %v520
      %v984 = vmul.f32 %v909, %v521
      %v985 = vmul.f32 %v913, %v522
      %v986 = vmul.f32 %v917, %v519
      %v987 = vmul.f32 %v921, %v520
      %v988 = vmul.f32 %v917, %v521
      %v989 = vmul.f32 %v921, %v522
      %v990 = vmul.f32 %v925, %v519
      %v991 = vmul.f32 %v929, %v520
      %v992 = vmul.f32 %v925, %v521
      %v993 = vmul.f32 %v929, %v522
      %v994 = vmul.f32 %v933, %v519
      %v995 = vmul.f32 %v937, %v520
      %v996 = vmul.f32 %v933, %v521
      %v997 = vmul.f32 %v937, %v522
      %v998 = vmul.f32 %v941, %v519
      %v999 = vmul.f32 %v945, %v520
      %v1000 = vmul.f32 %v941, %v521
      %v1001 = vmul.f32 %v945, %v522
      %v1002 = vmul.f32 %v949, %v519
      %v1003 = vmul.f32 %v953, %v520
      %v1004 = vmul.f32 %v949, %v521
      %v1005 = vmul.f32 %v953, %v522
      %v1006 = vmul.f32 %v957, %v519
      %v1007 = vmul.f32 %v961, %v520
      %v1008 = vmul.f32 %v957, %v521
      %v1009 = vmul.f32 %v961, %v522
      %1010 = vmatprep.subr.mxu0 %v524
      %1011 = vmatpush1.xpose.msra.mxu0 %v523
      %1012 = vmatprep.subr.mxu0 %v526
      %1013 = vmatpush1.xpose.msra.mxu0 %v525
      %1014 = vmatprep.subr.mxu0 0.0
      %1015 = vmatpush1.xpose.msra.mxu0 0.0
      %1016 = vmatprep.subr.mxu0 0.0
      %1017 = vmatpush1.xpose.msra.mxu0 0.0
      %1018 = vmatprep.subr.mxu0 0.0
      %1019 = vmatpush1.xpose.msra.mxu0 0.0
      %1020 = vmatprep.subr.mxu0 0.0
      %1021 = vmatpush1.xpose.msra.mxu0 0.0
      %1022 = vmatprep.subr.mxu0 0.0
      %1023 = vmatpush1.xpose.msra.mxu0 0.0
      %1024 = vmatprep.subr.mxu0 0.0
      %1025 = vmatpush1.xpose.msra.mxu0 0.0
      %1026 = vmatprep.subr.mxu0 0.0
      %1027 = vmatpush1.xpose.msra.mxu0 0.0
      %1028 = vmatprep.subr.mxu0 0.0
      %1029 = vmatpush1.xpose.msra.mxu0 0.0
      %1030 = vmatprep.subr.mxu0 0.0
      %1031 = vmatpush1.xpose.msra.mxu0 0.0
      %1032 = vmatprep.subr.mxu0 0.0
      %1033 = vmatpush1.xpose.msra.mxu0 0.0
      %1034 = vmatprep.subr.mxu0 0.0
      %1035 = vmatpush1.xpose.msra.mxu0 0.0
      %1036 = vmatprep.subr.mxu0 0.0
      %1037 = vmatpush1.xpose.msra.mxu0 0.0
      %1038 = vmatprep.subr.mxu0 0.0
      %1039 = vmatpush1.xpose.msra.mxu0 0.0
      %1040 = vmatprep.subr.mxu0 0.0
      %1041 = vmatpush1.xpose.msra.mxu0 0.0
      %1042 = vmatprep.subr.mxu0 0.0
      %1043 = vmatpush1.xpose.msra.mxu0 0.0
      %1044 = vmatprep.subr.mxu0 0.0
      %1045 = vmatpush1.xpose.msra.mxu0 0.0
      %1046 = vmatprep.subr.mxu0 0.0
      %1047 = vmatpush1.xpose.msra.mxu0 0.0
      %1048 = vmatprep.subr.mxu0 0.0
      %1049 = vmatpush1.xpose.msra.mxu0 0.0
      %1050 = vmatprep.subr.mxu0 0.0
      %1051 = vmatpush1.xpose.msra.mxu0 0.0
      %1052 = vmatprep.subr.mxu0 0.0
      %1053 = vmatpush1.xpose.msra.mxu0 0.0
      %1054 = vmatprep.subr.mxu0 0.0
      %1055 = vmatpush1.xpose.msra.mxu0 0.0
      %1056 = vmatprep.subr.mxu0 0.0
      %1057 = vmatpush1.xpose.msra.mxu0 0.0
      %1058 = vmatprep.subr.mxu0 0.0
      %1059 = vmatpush1.xpose.msra.mxu0 0.0
      %1060 = vmatprep.subr.mxu0 0.0
      %1061 = vmatpush1.xpose.msra.mxu0 0.0
      %1062 = vmatprep.subr.mxu0 0.0
      %1063 = vmatpush1.xpose.msra.mxu0 0.0
      %1064 = vmatprep.subr.mxu0 0.0
      %1065 = vmatpush1.xpose.msra.mxu0 0.0
      %1066 = vmatprep.subr.mxu0 0.0
      %1067 = vmatpush1.xpose.msra.mxu0 0.0
      %1068 = vmatprep.subr.mxu0 0.0
      %1069 = vmatpush1.xpose.msra.mxu0 0.0
      %1070 = vmatprep.subr.mxu0 0.0
      %1071 = vmatpush1.xpose.msra.mxu0 0.0
      %1072 = vmatprep.subr.mxu0 0.0
      %1073 = vmatpush1.xpose.msra.mxu0 0.0
      %1074 = vmatprep.mubr.f32.mxu0 %v815
      %1075 = vmatmul.mubr.f32.gmra.mrb[0].mxu0 %v814
      %v1076 = vpop.f32.mrb[0].mxu0
      %v1077 = vadd.f32 0.0, %v1076
      %v1078 = vpop.f32.mrb[0].mxu0
      %1079 = vmatprep.mubr.f32.mxu0 %v817
      %1080 = vmatmul.mubr.f32.gmra.mrb[0].mxu0 %v816
      %v1081 = vpop.f32.mrb[0].mxu0
      %v1082 = vadd.f32 0.0, %v1081
      %v1083 = vpop.f32.mrb[0].mxu0
      %1084 = vmatprep.mubr.f32.mxu0 %v819
      %1085 = vmatmul.mubr.f32.gmra.mrb[0].mxu0 %v818
      %v1086 = vpop.f32.mrb[0].mxu0
      %v1087 = vadd.f32 0.0, %v1086
      %v1088 = vpop.f32.mrb[0].mxu0
      %1089 = vmatprep.mubr.f32.mxu0 %v821
      %1090 = vmatmul.mubr.f32.gmra.mrb[0].mxu0 %v820
      %v1091 = vpop.f32.mrb[0].mxu0
      %v1092 = vadd.f32 0.0, %v1091
      %v1093 = vpop.f32.mrb[0].mxu0
      %1094 = vmatprep.mubr.f32.mxu0 %v823
      %1095 = vmatmul.mubr.f32.gmra.mrb[0].mxu0 %v822
      %v1096 = vpop.f32.mrb[0].mxu0
      %v1097 = vadd.f32 0.0, %v1096
      %v1098 = vpop.f32.mrb[0].mxu0
      %1099 = vmatprep.mubr.f32.mxu0 %v825
      %1100 = vmatmul.mubr.f32.gmra.mrb[0].mxu0 %v824
      %v1101 = vpop.f32.mrb[0].mxu0
      %v1102 = vadd.f32 0.0, %v1101
      %v1103 = vpop.f32.mrb[0].mxu0
      %1104 = vmatprep.mubr.f32.mxu0 %v827
      %1105 = vmatmul.mubr.f32.gmra.mrb[0].mxu0 %v826
      %v1106 = vpop.f32.mrb[0].mxu0
      %v1107 = vadd.f32 0.0, %v1106
      %v1108 = vpop.f32.mrb[0].mxu0
      %1109 = vmatprep.mubr.f32.mxu0 %v829
      %1110 = vmatmul.mubr.f32.gmra.mrb[0].mxu0 %v828
      %v1111 = vpop.f32.mrb[0].mxu0
      %v1112 = vadd.f32 0.0, %v1111
      %v1113 = vpop.f32.mrb[0].mxu0
      %1114 = vmatprep.mubr.f32.mxu0 %v831
      %1115 = vmatmul.mubr.f32.gmra.mrb[0].mxu0 %v830
      %v1116 = vpop.f32.mrb[0].mxu0
      %v1117 = vadd.f32 0.0, %v1116
      %v1118 = vpop.f32.mrb[0].mxu0
      %1119 = vmatprep.mubr.f32.mxu0 %v833
      %1120 = vmatmul.mubr.f32.gmra.mrb[0].mxu0 %v832
      %v1121 = vpop.f32.mrb[0].mxu0
      %v1122 = vadd.f32 0.0, %v1121
      %v1123 = vpop.f32.mrb[0].mxu0
      %1124 = vmatprep.mubr.f32.mxu0 %v835
      %1125 = vmatmul.mubr.f32.gmra.mrb[0].mxu0 %v834
      %v1126 = vpop.f32.mrb[0].mxu0
      %v1127 = vadd.f32 0.0, %v1126
      %v1128 = vpop.f32.mrb[0].mxu0
      %1129 = vmatprep.mubr.f32.mxu0 %v837
      %1130 = vmatmul.mubr.f32.gmra.mrb[0].mxu0 %v836
      %v1131 = vpop.f32.mrb[0].mxu0
      %v1132 = vadd.f32 0.0, %v1131
      %v1133 = vpop.f32.mrb[0].mxu0
      %1134 = vmatprep.mubr.f32.mxu0 %v839
      %1135 = vmatmul.mubr.f32.gmra.mrb[0].mxu0 %v838
      %v1136 = vpop.f32.mrb[0].mxu0
      %v1137 = vadd.f32 0.0, %v1136
      %v1138 = vpop.f32.mrb[0].mxu0
      %1139 = vmatprep.mubr.f32.mxu0 %v841
      %1140 = vmatmul.mubr.f32.gmra.mrb[0].mxu0 %v840
      %v1141 = vpop.f32.mrb[0].mxu0
      %v1142 = vadd.f32 0.0, %v1141
      %v1143 = vpop.f32.mrb[0].mxu0
      %1144 = vmatprep.mubr.f32.mxu0 %v843
      %1145 = vmatmul.mubr.f32.gmra.mrb[0].mxu0 %v842
      %v1146 = vpop.f32.mrb[0].mxu0
      %v1147 = vadd.f32 0.0, %v1146
      %v1148 = vpop.f32.mrb[0].mxu0
      %1149 = vmatprep.mubr.f32.mxu0 %v845
      %1150 = vmatmul.mubr.f32.gmra.mrb[0].mxu0 %v844
      %v1151 = vpop.f32.mrb[0].mxu0
      %v1152 = vadd.f32 0.0, %v1151
      %v1153 = vpop.f32.mrb[0].mxu0
      %1154 = vdwg.mxu0
      %1155 = vmatprep.subr.mxu0 %v524
      %1156 = vmatpush1.xpose.msra.mxu0 %v523
      %1157 = vmatprep.subr.mxu0 %v526
      %1158 = vmatpush1.xpose.msra.mxu0 %v525
      %1159 = vmatprep.subr.mxu0 0.0
      %1160 = vmatpush1.xpose.msra.mxu0 0.0
      %1161 = vmatprep.subr.mxu0 0.0
      %1162 = vmatpush1.xpose.msra.mxu0 0.0
      %1163 = vmatprep.subr.mxu0 0.0
      %1164 = vmatpush1.xpose.msra.mxu0 0.0
      %1165 = vmatprep.subr.mxu0 0.0
      %1166 = vmatpush1.xpose.msra.mxu0 0.0
      %1167 = vmatprep.subr.mxu0 0.0
      %1168 = vmatpush1.xpose.msra.mxu0 0.0
      %1169 = vmatprep.subr.mxu0 0.0
      %1170 = vmatpush1.xpose.msra.mxu0 0.0
      %1171 = vmatprep.subr.mxu0 0.0
      %1172 = vmatpush1.xpose.msra.mxu0 0.0
      %1173 = vmatprep.subr.mxu0 0.0
      %1174 = vmatpush1.xpose.msra.mxu0 0.0
      %1175 = vmatprep.subr.mxu0 0.0
      %1176 = vmatpush1.xpose.msra.mxu0 0.0
      %1177 = vmatprep.subr.mxu0 0.0
      %1178 = vmatpush1.xpose.msra.mxu0 0.0
      %1179 = vmatprep.subr.mxu0 0.0
      %1180 = vmatpush1.xpose.msra.mxu0 0.0
      %1181 = vmatprep.subr.mxu0 0.0
      %1182 = vmatpush1.xpose.msra.mxu0 0.0
      %1183 = vmatprep.subr.mxu0 0.0
      %1184 = vmatpush1.xpose.msra.mxu0 0.0
      %1185 = vmatprep.subr.mxu0 0.0
      %1186 = vmatpush1.xpose.msra.mxu0 0.0
      %1187 = vmatprep.subr.mxu0 0.0
      %1188 = vmatpush1.xpose.msra.mxu0 0.0
      %1189 = vmatprep.subr.mxu0 0.0
      %1190 = vmatpush1.xpose.msra.mxu0 0.0
      %1191 = vmatprep.subr.mxu0 0.0
      %1192 = vmatpush1.xpose.msra.mxu0 0.0
      %1193 = vmatprep.subr.mxu0 0.0
      %1194 = vmatpush1.xpose.msra.mxu0 0.0
      %1195 = vmatprep.subr.mxu0 0.0
      %1196 = vmatpush1.xpose.msra.mxu0 0.0
      %1197 = vmatprep.subr.mxu0 0.0
      %1198 = vmatpush1.xpose.msra.mxu0 0.0
      %1199 = vmatprep.subr.mxu0 0.0
      %1200 = vmatpush1.xpose.msra.mxu0 0.0
      %1201 = vmatprep.subr.mxu0 0.0
      %1202 = vmatpush1.xpose.msra.mxu0 0.0
      %1203 = vmatprep.subr.mxu0 0.0
      %1204 = vmatpush1.xpose.msra.mxu0 0.0
      %1205 = vmatprep.subr.mxu0 0.0
      %1206 = vmatpush1.xpose.msra.mxu0 0.0
      %1207 = vmatprep.subr.mxu0 0.0
      %1208 = vmatpush1.xpose.msra.mxu0 0.0
      %1209 = vmatprep.subr.mxu0 0.0
      %1210 = vmatpush1.xpose.msra.mxu0 0.0
      %1211 = vmatprep.subr.mxu0 0.0
      %1212 = vmatpush1.xpose.msra.mxu0 0.0
      %1213 = vmatprep.subr.mxu0 0.0
      %1214 = vmatpush1.xpose.msra.mxu0 0.0
      %1215 = vmatprep.subr.mxu0 0.0
      %1216 = vmatpush1.xpose.msra.mxu0 0.0
      %1217 = vmatprep.subr.mxu0 0.0
      %1218 = vmatpush1.xpose.msra.mxu0 0.0
      %1219 = vmatprep.mubr.f32.mxu0 %v979
      %1220 = vmatmul.mubr.f32.gmra.mrb[0].mxu0 %v978
      %v1221 = vpop.f32.mrb[0].mxu0
      %v1222 = vadd.f32 0.0, %v1221
      %v1223 = vpop.f32.mrb[0].mxu0
      %1224 = vmatprep.mubr.f32.mxu0 %v981
      %1225 = vmatmul.mubr.f32.gmra.mrb[0].mxu0 %v980
      %v1226 = vpop.f32.mrb[0].mxu0
      %v1227 = vadd.f32 0.0, %v1226
      %v1228 = vpop.f32.mrb[0].mxu0
      %1229 = vmatprep.mubr.f32.mxu0 %v983
      %1230 = vmatmul.mubr.f32.gmra.mrb[0].mxu0 %v982
      %v1231 = vpop.f32.mrb[0].mxu0
      %v1232 = vadd.f32 0.0, %v1231
      %v1233 = vpop.f32.mrb[0].mxu0
      %1234 = vmatprep.mubr.f32.mxu0 %v985
      %1235 = vmatmul.mubr.f32.gmra.mrb[0].mxu0 %v984
      %v1236 = vpop.f32.mrb[0].mxu0
      %v1237 = vadd.f32 0.0, %v1236
      %v1238 = vpop.f32.mrb[0].mxu0
      %1239 = vmatprep.mubr.f32.mxu0 %v987
      %1240 = vmatmul.mubr.f32.gmra.mrb[0].mxu0 %v986
      %v1241 = vpop.f32.mrb[0].mxu0
      %v1242 = vadd.f32 0.0, %v1241
      %v1243 = vpop.f32.mrb[0].mxu0
      %1244 = vmatprep.mubr.f32.mxu0 %v989
      %1245 = vmatmul.mubr.f32.gmra.mrb[0].mxu0 %v988
      %v1246 = vpop.f32.mrb[0].mxu0
      %v1247 = vadd.f32 0.0, %v1246
      %v1248 = vpop.f32.mrb[0].mxu0
      %1249 = vmatprep.mubr.f32.mxu0 %v991
      %1250 = vmatmul.mubr.f32.gmra.mrb[0].mxu0 %v990
      %v1251 = vpop.f32.mrb[0].mxu0
      %v1252 = vadd.f32 0.0, %v1251
      %v1253 = vpop.f32.mrb[0].mxu0
      %1254 = vmatprep.mubr.f32.mxu0 %v993
      %1255 = vmatmul.mubr.f32.gmra.mrb[0].mxu0 %v992
      %v1256 = vpop.f32.mrb[0].mxu0
      %v1257 = vadd.f32 0.0, %v1256
      %v1258 = vpop.f32.mrb[0].mxu0
      %1259 = vmatprep.mubr.f32.mxu0 %v995
      %1260 = vmatmul.mubr.f32.gmra.mrb[0].mxu0 %v994
      %v1261 = vpop.f32.mrb[0].mxu0
      %v1262 = vadd.f32 0.0, %v1261
      %v1263 = vpop.f32.mrb[0].mxu0
      %1264 = vmatprep.mubr.f32.mxu0 %v997
      %1265 = vmatmul.mubr.f32.gmra.mrb[0].mxu0 %v996
      %v1266 = vpop.f32.mrb[0].mxu0
      %v1267 = vadd.f32 0.0, %v1266
      %v1268 = vpop.f32.mrb[0].mxu0
      %1269 = vmatprep.mubr.f32.mxu0 %v999
      %1270 = vmatmul.mubr.f32.gmra.mrb[0].mxu0 %v998
      %v1271 = vpop.f32.mrb[0].mxu0
      %v1272 = vadd.f32 0.0, %v1271
      %v1273 = vpop.f32.mrb[0].mxu0
      %1274 = vmatprep.mubr.f32.mxu0 %v1001
      %1275 = vmatmul.mubr.f32.gmra.mrb[0].mxu0 %v1000
      %v1276 = vpop.f32.mrb[0].mxu0
      %v1277 = vadd.f32 0.0, %v1276
      %v1278 = vpop.f32.mrb[0].mxu0
      %1279 = vmatprep.mubr.f32.mxu0 %v1003
      %1280 = vmatmul.mubr.f32.gmra.mrb[0].mxu0 %v1002
      %v1281 = vpop.f32.mrb[0].mxu0
      %v1282 = vadd.f32 0.0, %v1281
      %v1283 = vpop.f32.mrb[0].mxu0
      %1284 = vmatprep.mubr.f32.mxu0 %v1005
      %1285 = vmatmul.mubr.f32.gmra.mrb[0].mxu0 %v1004
      %v1286 = vpop.f32.mrb[0].mxu0
      %v1287 = vadd.f32 0.0, %v1286
      %v1288 = vpop.f32.mrb[0].mxu0
      %1289 = vmatprep.mubr.f32.mxu0 %v1007
      %1290 = vmatmul.mubr.f32.gmra.mrb[0].mxu0 %v1006
      %v1291 = vpop.f32.mrb[0].mxu0
      %v1292 = vadd.f32 0.0, %v1291
      %v1293 = vpop.f32.mrb[0].mxu0
      %1294 = vmatprep.mubr.f32.mxu0 %v1009
      %1295 = vmatmul.mubr.f32.gmra.mrb[0].mxu0 %v1008
      %v1296 = vpop.f32.mrb[0].mxu0
      %v1297 = vadd.f32 0.0, %v1296
      %v1298 = vpop.f32.mrb[0].mxu0
      %1299 = vdwg.mxu0
      %v1301 = vsel %vm532, %v1077, 0
      %v1304 = vsel %vm532, %v1082, 0
      %1306 = vmatprep.subr.mxu0 0.0
      %1307 = vmatpush1.msra.mxu0 %v1222
      %1308 = vmatprep.subr.mxu0 0.0
      %1309 = vmatpush1.msra.mxu0 %v1227
      %1310 = vmatprep.subr.mxu0 0.0
      %1311 = vmatpush1.msra.mxu0 0.0
      %1312 = vmatprep.subr.mxu0 0.0
      %1313 = vmatpush1.msra.mxu0 0.0
      %1314 = vmatprep.subr.mxu0 0.0
      %1315 = vmatpush1.msra.mxu0 0.0
      %1316 = vmatprep.subr.mxu0 0.0
      %1317 = vmatpush1.msra.mxu0 0.0
      %1318 = vmatprep.subr.mxu0 0.0
      %1319 = vmatpush1.msra.mxu0 0.0
      %1320 = vmatprep.subr.mxu0 0.0
      %1321 = vmatpush1.msra.mxu0 0.0
      %1322 = vmatprep.subr.mxu0 0.0
      %1323 = vmatpush1.msra.mxu0 0.0
      %1324 = vmatprep.subr.mxu0 0.0
      %1325 = vmatpush1.msra.mxu0 0.0
      %1326 = vmatprep.subr.mxu0 0.0
      %1327 = vmatpush1.msra.mxu0 0.0
      %1328 = vmatprep.subr.mxu0 0.0
      %1329 = vmatpush1.msra.mxu0 0.0
      %1330 = vmatprep.subr.mxu0 0.0
      %1331 = vmatpush1.msra.mxu0 0.0
      %1332 = vmatprep.subr.mxu0 0.0
      %1333 = vmatpush1.msra.mxu0 0.0
      %1334 = vmatprep.subr.mxu0 0.0
      %1335 = vmatpush1.msra.mxu0 0.0
      %1336 = vmatprep.subr.mxu0 0.0
      %1337 = vmatpush1.msra.mxu0 0.0
      %1338 = vmatprep.subr.mxu0 0.0
      %1339 = vmatpush1.msra.mxu0 0.0
      %1340 = vmatprep.subr.mxu0 0.0
      %1341 = vmatpush1.msra.mxu0 0.0
      %1342 = vmatprep.subr.mxu0 0.0
      %1343 = vmatpush1.msra.mxu0 0.0
      %1344 = vmatprep.subr.mxu0 0.0
      %1345 = vmatpush1.msra.mxu0 0.0
      %1346 = vmatprep.subr.mxu0 0.0
      %1347 = vmatpush1.msra.mxu0 0.0
      %1348 = vmatprep.subr.mxu0 0.0
      %1349 = vmatpush1.msra.mxu0 0.0
      %1350 = vmatprep.subr.mxu0 0.0
      %1351 = vmatpush1.msra.mxu0 0.0
      %1352 = vmatprep.subr.mxu0 0.0
      %1353 = vmatpush1.msra.mxu0 0.0
      %1354 = vmatprep.subr.mxu0 0.0
      %1355 = vmatpush1.msra.mxu0 0.0
      %1356 = vmatprep.subr.mxu0 0.0
      %1357 = vmatpush1.msra.mxu0 0.0
      %1358 = vmatprep.subr.mxu0 0.0
      %1359 = vmatpush1.msra.mxu0 0.0
      %1360 = vmatprep.subr.mxu0 0.0
      %1361 = vmatpush1.msra.mxu0 0.0
      %1362 = vmatprep.subr.mxu0 0.0
      %1363 = vmatpush1.msra.mxu0 0.0
      %1364 = vmatprep.subr.mxu0 0.0
      %1365 = vmatpush1.msra.mxu0 0.0
      %1366 = vmatprep.subr.mxu0 0.0
      %1367 = vmatpush1.msra.mxu0 0.0
      %1368 = vmatprep.subr.mxu0 0.0
      %1369 = vmatpush1.msra.mxu0 0.0
      %1370 = vmatprep.mubr.f32.mxu0 0.0
      %1371 = vmatmul.mubr.f32.gmra.mrb[0].mxu0 %v1301
      %v1372 = vpop.f32.mrb[0].mxu0
      %v1373 = vadd.f32 0.0, %v1372
      %v1374 = vpop.f32.mrb[0].mxu0
      %1375 = vmatprep.mubr.f32.mxu0 0.0
      %1376 = vmatmul.mubr.f32.gmra.mrb[0].mxu0 %v1304
      %v1377 = vpop.f32.mrb[0].mxu0
      %v1378 = vadd.f32 0.0, %v1377
      %v1379 = vpop.f32.mrb[0].mxu0
      %1380 = vdwg.mxu0
      %v1382 = vsel %vm532, %v1087, 0
      %v1385 = vsel %vm532, %v1092, 0
      %1387 = vmatprep.subr.mxu0 0.0
      %1388 = vmatpush1.msra.mxu0 %v1232
      %1389 = vmatprep.subr.mxu0 0.0
      %1390 = vmatpush1.msra.mxu0 %v1237
      %1391 = vmatprep.subr.mxu0 0.0
      %1392 = vmatpush1.msra.mxu0 0.0
      %1393 = vmatprep.subr.mxu0 0.0
      %1394 = vmatpush1.msra.mxu0 0.0
      %1395 = vmatprep.subr.mxu0 0.0
      %1396 = vmatpush1.msra.mxu0 0.0
      %1397 = vmatprep.subr.mxu0 0.0
      %1398 = vmatpush1.msra.mxu0 0.0
      %1399 = vmatprep.subr.mxu0 0.0
      %1400 = vmatpush1.msra.mxu0 0.0
      %1401 = vmatprep.subr.mxu0 0.0
      %1402 = vmatpush1.msra.mxu0 0.0
      %1403 = vmatprep.subr.mxu0 0.0
      %1404 = vmatpush1.msra.mxu0 0.0
      %1405 = vmatprep.subr.mxu0 0.0
      %1406 = vmatpush1.msra.mxu0 0.0
      %1407 = vmatprep.subr.mxu0 0.0
      %1408 = vmatpush1.msra.mxu0 0.0
      %1409 = vmatprep.subr.mxu0 0.0
      %1410 = vmatpush1.msra.mxu0 0.0
      %1411 = vmatprep.subr.mxu0 0.0
      %1412 = vmatpush1.msra.mxu0 0.0
      %1413 = vmatprep.subr.mxu0 0.0
      %1414 = vmatpush1.msra.mxu0 0.0
      %1415 = vmatprep.subr.mxu0 0.0
      %1416 = vmatpush1.msra.mxu0 0.0
      %1417 = vmatprep.subr.mxu0 0.0
      %1418 = vmatpush1.msra.mxu0 0.0
      %1419 = vmatprep.subr.mxu0 0.0
      %1420 = vmatpush1.msra.mxu0 0.0
      %1421 = vmatprep.subr.mxu0 0.0
      %1422 = vmatpush1.msra.mxu0 0.0
      %1423 = vmatprep.subr.mxu0 0.0
      %1424 = vmatpush1.msra.mxu0 0.0
      %1425 = vmatprep.subr.mxu0 0.0
      %1426 = vmatpush1.msra.mxu0 0.0
      %1427 = vmatprep.subr.mxu0 0.0
      %1428 = vmatpush1.msra.mxu0 0.0
      %1429 = vmatprep.subr.mxu0 0.0
      %1430 = vmatpush1.msra.mxu0 0.0
      %1431 = vmatprep.subr.mxu0 0.0
      %1432 = vmatpush1.msra.mxu0 0.0
      %1433 = vmatprep.subr.mxu0 0.0
      %1434 = vmatpush1.msra.mxu0 0.0
      %1435 = vmatprep.subr.mxu0 0.0
      %1436 = vmatpush1.msra.mxu0 0.0
      %1437 = vmatprep.subr.mxu0 0.0
      %1438 = vmatpush1.msra.mxu0 0.0
      %1439 = vmatprep.subr.mxu0 0.0
      %1440 = vmatpush1.msra.mxu0 0.0
      %1441 = vmatprep.subr.mxu0 0.0
      %1442 = vmatpush1.msra.mxu0 0.0
      %1443 = vmatprep.subr.mxu0 0.0
      %1444 = vmatpush1.msra.mxu0 0.0
      %1445 = vmatprep.subr.mxu0 0.0
      %1446 = vmatpush1.msra.mxu0 0.0
      %1447 = vmatprep.subr.mxu0 0.0
      %1448 = vmatpush1.msra.mxu0 0.0
      %1449 = vmatprep.subr.mxu0 0.0
      %1450 = vmatpush1.msra.mxu0 0.0
      %1451 = vmatprep.mubr.f32.mxu0 0.0
      %1452 = vmatmul.mubr.f32.gmra.mrb[0].mxu0 %v1382
      %v1453 = vpop.f32.mrb[0].mxu0
      %v1454 = vadd.f32 0.0, %v1453
      %v1455 = vpop.f32.mrb[0].mxu0
      %1456 = vmatprep.mubr.f32.mxu0 0.0
      %1457 = vmatmul.mubr.f32.gmra.mrb[0].mxu0 %v1385
      %v1458 = vpop.f32.mrb[0].mxu0
      %v1459 = vadd.f32 0.0, %v1458
      %v1460 = vpop.f32.mrb[0].mxu0
      %1461 = vdwg.mxu0
      %v1463 = vsel %vm532, %v1097, 0
      %v1466 = vsel %vm532, %v1102, 0
      %1468 = vmatprep.subr.mxu0 0.0
      %1469 = vmatpush1.msra.mxu0 %v1242
      %1470 = vmatprep.subr.mxu0 0.0
      %1471 = vmatpush1.msra.mxu0 %v1247
      %1472 = vmatprep.subr.mxu0 0.0
      %1473 = vmatpush1.msra.mxu0 0.0
      %1474 = vmatprep.subr.mxu0 0.0
      %1475 = vmatpush1.msra.mxu0 0.0
      %1476 = vmatprep.subr.mxu0 0.0
      %1477 = vmatpush1.msra.mxu0 0.0
      %1478 = vmatprep.subr.mxu0 0.0
      %1479 = vmatpush1.msra.mxu0 0.0
      %1480 = vmatprep.subr.mxu0 0.0
      %1481 = vmatpush1.msra.mxu0 0.0
      %1482 = vmatprep.subr.mxu0 0.0
      %1483 = vmatpush1.msra.mxu0 0.0
      %1484 = vmatprep.subr.mxu0 0.0
      %1485 = vmatpush1.msra.mxu0 0.0
      %1486 = vmatprep.subr.mxu0 0.0
      %1487 = vmatpush1.msra.mxu0 0.0
      %1488 = vmatprep.subr.mxu0 0.0
      %1489 = vmatpush1.msra.mxu0 0.0
      %1490 = vmatprep.subr.mxu0 0.0
      %1491 = vmatpush1.msra.mxu0 0.0
      %1492 = vmatprep.subr.mxu0 0.0
      %1493 = vmatpush1.msra.mxu0 0.0
      %1494 = vmatprep.subr.mxu0 0.0
      %1495 = vmatpush1.msra.mxu0 0.0
      %1496 = vmatprep.subr.mxu0 0.0
      %1497 = vmatpush1.msra.mxu0 0.0
      %1498 = vmatprep.subr.mxu0 0.0
      %1499 = vmatpush1.msra.mxu0 0.0
      %1500 = vmatprep.subr.mxu0 0.0
      %1501 = vmatpush1.msra.mxu0 0.0
      %1502 = vmatprep.subr.mxu0 0.0
      %1503 = vmatpush1.msra.mxu0 0.0
      %1504 = vmatprep.subr.mxu0 0.0
      %1505 = vmatpush1.msra.mxu0 0.0
      %1506 = vmatprep.subr.mxu0 0.0
      %1507 = vmatpush1.msra.mxu0 0.0
      %1508 = vmatprep.subr.mxu0 0.0
      %1509 = vmatpush1.msra.mxu0 0.0
      %1510 = vmatprep.subr.mxu0 0.0
      %1511 = vmatpush1.msra.mxu0 0.0
      %1512 = vmatprep.subr.mxu0 0.0
      %1513 = vmatpush1.msra.mxu0 0.0
      %1514 = vmatprep.subr.mxu0 0.0
      %1515 = vmatpush1.msra.mxu0 0.0
      %1516 = vmatprep.subr.mxu0 0.0
      %1517 = vmatpush1.msra.mxu0 0.0
      %1518 = vmatprep.subr.mxu0 0.0
      %1519 = vmatpush1.msra.mxu0 0.0
      %1520 = vmatprep.subr.mxu0 0.0
      %1521 = vmatpush1.msra.mxu0 0.0
      %1522 = vmatprep.subr.mxu0 0.0
      %1523 = vmatpush1.msra.mxu0 0.0
      %1524 = vmatprep.subr.mxu0 0.0
      %1525 = vmatpush1.msra.mxu0 0.0
      %1526 = vmatprep.subr.mxu0 0.0
      %1527 = vmatpush1.msra.mxu0 0.0
      %1528 = vmatprep.subr.mxu0 0.0
      %1529 = vmatpush1.msra.mxu0 0.0
      %1530 = vmatprep.subr.mxu0 0.0
      %1531 = vmatpush1.msra.mxu0 0.0
      %1532 = vmatprep.mubr.f32.mxu0 0.0
      %1533 = vmatmul.mubr.f32.gmra.mrb[0].mxu0 %v1463
      %v1534 = vpop.f32.mrb[0].mxu0
      %v1535 = vadd.f32 0.0, %v1534
      %v1536 = vpop.f32.mrb[0].mxu0
      %1537 = vmatprep.mubr.f32.mxu0 0.0
      %1538 = vmatmul.mubr.f32.gmra.mrb[0].mxu0 %v1466
      %v1539 = vpop.f32.mrb[0].mxu0
      %v1540 = vadd.f32 0.0, %v1539
      %v1541 = vpop.f32.mrb[0].mxu0
      %1542 = vdwg.mxu0
      %v1544 = vsel %vm532, %v1107, 0
      %v1547 = vsel %vm532, %v1112, 0
      %1549 = vmatprep.subr.mxu0 0.0
      %1550 = vmatpush1.msra.mxu0 %v1252
      %1551 = vmatprep.subr.mxu0 0.0
      %1552 = vmatpush1.msra.mxu0 %v1257
      %1553 = vmatprep.subr.mxu0 0.0
      %1554 = vmatpush1.msra.mxu0 0.0
      %1555 = vmatprep.subr.mxu0 0.0
      %1556 = vmatpush1.msra.mxu0 0.0
      %1557 = vmatprep.subr.mxu0 0.0
      %1558 = vmatpush1.msra.mxu0 0.0
      %1559 = vmatprep.subr.mxu0 0.0
      %1560 = vmatpush1.msra.mxu0 0.0
      %1561 = vmatprep.subr.mxu0 0.0
      %1562 = vmatpush1.msra.mxu0 0.0
      %1563 = vmatprep.subr.mxu0 0.0
      %1564 = vmatpush1.msra.mxu0 0.0
      %1565 = vmatprep.subr.mxu0 0.0
      %1566 = vmatpush1.msra.mxu0 0.0
      %1567 = vmatprep.subr.mxu0 0.0
      %1568 = vmatpush1.msra.mxu0 0.0
      %1569 = vmatprep.subr.mxu0 0.0
      %1570 = vmatpush1.msra.mxu0 0.0
      %1571 = vmatprep.subr.mxu0 0.0
      %1572 = vmatpush1.msra.mxu0 0.0
      %1573 = vmatprep.subr.mxu0 0.0
      %1574 = vmatpush1.msra.mxu0 0.0
      %1575 = vmatprep.subr.mxu0 0.0
      %1576 = vmatpush1.msra.mxu0 0.0
      %1577 = vmatprep.subr.mxu0 0.0
      %1578 = vmatpush1.msra.mxu0 0.0
      %1579 = vmatprep.subr.mxu0 0.0
      %1580 = vmatpush1.msra.mxu0 0.0
      %1581 = vmatprep.subr.mxu0 0.0
      %1582 = vmatpush1.msra.mxu0 0.0
      %1583 = vmatprep.subr.mxu0 0.0
      %1584 = vmatpush1.msra.mxu0 0.0
      %1585 = vmatprep.subr.mxu0 0.0
      %1586 = vmatpush1.msra.mxu0 0.0
      %1587 = vmatprep.subr.mxu0 0.0
      %1588 = vmatpush1.msra.mxu0 0.0
      %1589 = vmatprep.subr.mxu0 0.0
      %1590 = vmatpush1.msra.mxu0 0.0
      %1591 = vmatprep.subr.mxu0 0.0
      %1592 = vmatpush1.msra.mxu0 0.0
      %1593 = vmatprep.subr.mxu0 0.0
      %1594 = vmatpush1.msra.mxu0 0.0
      %1595 = vmatprep.subr.mxu0 0.0
      %1596 = vmatpush1.msra.mxu0 0.0
      %1597 = vmatprep.subr.mxu0 0.0
      %1598 = vmatpush1.msra.mxu0 0.0
      %1599 = vmatprep.subr.mxu0 0.0
      %1600 = vmatpush1.msra.mxu0 0.0
      %1601 = vmatprep.subr.mxu0 0.0
      %1602 = vmatpush1.msra.mxu0 0.0
      %1603 = vmatprep.subr.mxu0 0.0
      %1604 = vmatpush1.msra.mxu0 0.0
      %1605 = vmatprep.subr.mxu0 0.0
      %1606 = vmatpush1.msra.mxu0 0.0
      %1607 = vmatprep.subr.mxu0 0.0
      %1608 = vmatpush1.msra.mxu0 0.0
      %1609 = vmatprep.subr.mxu0 0.0
      %1610 = vmatpush1.msra.mxu0 0.0
      %1611 = vmatprep.subr.mxu0 0.0
      %1612 = vmatpush1.msra.mxu0 0.0
      %1613 = vmatprep.mubr.f32.mxu0 0.0
      %1614 = vmatmul.mubr.f32.gmra.mrb[0].mxu0 %v1544
      %v1615 = vpop.f32.mrb[0].mxu0
      %v1616 = vadd.f32 0.0, %v1615
      %v1617 = vpop.f32.mrb[0].mxu0
      %1618 = vmatprep.mubr.f32.mxu0 0.0
      %1619 = vmatmul.mubr.f32.gmra.mrb[0].mxu0 %v1547
      %v1620 = vpop.f32.mrb[0].mxu0
      %v1621 = vadd.f32 0.0, %v1620
      %v1622 = vpop.f32.mrb[0].mxu0
      %1623 = vdwg.mxu0
      %v1625 = vsel %vm532, %v1117, 0
      %v1628 = vsel %vm532, %v1122, 0
      %1630 = vmatprep.subr.mxu0 0.0
      %1631 = vmatpush1.msra.mxu0 %v1262
      %1632 = vmatprep.subr.mxu0 0.0
      %1633 = vmatpush1.msra.mxu0 %v1267
      %1634 = vmatprep.subr.mxu0 0.0
      %1635 = vmatpush1.msra.mxu0 0.0
      %1636 = vmatprep.subr.mxu0 0.0
      %1637 = vmatpush1.msra.mxu0 0.0
      %1638 = vmatprep.subr.mxu0 0.0
      %1639 = vmatpush1.msra.mxu0 0.0
      %1640 = vmatprep.subr.mxu0 0.0
      %1641 = vmatpush1.msra.mxu0 0.0
      %1642 = vmatprep.subr.mxu0 0.0
      %1643 = vmatpush1.msra.mxu0 0.0
      %1644 = vmatprep.subr.mxu0 0.0
      %1645 = vmatpush1.msra.mxu0 0.0
      %1646 = vmatprep.subr.mxu0 0.0
      %1647 = vmatpush1.msra.mxu0 0.0
      %1648 = vmatprep.subr.mxu0 0.0
      %1649 = vmatpush1.msra.mxu0 0.0
      %1650 = vmatprep.subr.mxu0 0.0
      %1651 = vmatpush1.msra.mxu0 0.0
      %1652 = vmatprep.subr.mxu0 0.0
      %1653 = vmatpush1.msra.mxu0 0.0
      %1654 = vmatprep.subr.mxu0 0.0
      %1655 = vmatpush1.msra.mxu0 0.0
      %1656 = vmatprep.subr.mxu0 0.0
      %1657 = vmatpush1.msra.mxu0 0.0
      %1658 = vmatprep.subr.mxu0 0.0
      %1659 = vmatpush1.msra.mxu0 0.0
      %1660 = vmatprep.subr.mxu0 0.0
      %1661 = vmatpush1.msra.mxu0 0.0
      %1662 = vmatprep.subr.mxu0 0.0
      %1663 = vmatpush1.msra.mxu0 0.0
      %1664 = vmatprep.subr.mxu0 0.0
      %1665 = vmatpush1.msra.mxu0 0.0
      %1666 = vmatprep.subr.mxu0 0.0
      %1667 = vmatpush1.msra.mxu0 0.0
      %1668 = vmatprep.subr.mxu0 0.0
      %1669 = vmatpush1.msra.mxu0 0.0
      %1670 = vmatprep.subr.mxu0 0.0
      %1671 = vmatpush1.msra.mxu0 0.0
      %1672 = vmatprep.subr.mxu0 0.0
      %1673 = vmatpush1.msra.mxu0 0.0
      %1674 = vmatprep.subr.mxu0 0.0
      %1675 = vmatpush1.msra.mxu0 0.0
      %1676 = vmatprep.subr.mxu0 0.0
      %1677 = vmatpush1.msra.mxu0 0.0
      %1678 = vmatprep.subr.mxu0 0.0
      %1679 = vmatpush1.msra.mxu0 0.0
      %1680 = vmatprep.subr.mxu0 0.0
      %1681 = vmatpush1.msra.mxu0 0.0
      %1682 = vmatprep.subr.mxu0 0.0
      %1683 = vmatpush1.msra.mxu0 0.0
      %1684 = vmatprep.subr.mxu0 0.0
      %1685 = vmatpush1.msra.mxu0 0.0
      %1686 = vmatprep.subr.mxu0 0.0
      %1687 = vmatpush1.msra.mxu0 0.0
      %1688 = vmatprep.subr.mxu0 0.0
      %1689 = vmatpush1.msra.mxu0 0.0
      %1690 = vmatprep.subr.mxu0 0.0
      %1691 = vmatpush1.msra.mxu0 0.0
      %1692 = vmatprep.subr.mxu0 0.0
      %1693 = vmatpush1.msra.mxu0 0.0
      %1694 = vmatprep.mubr.f32.mxu0 0.0
      %1695 = vmatmul.mubr.f32.gmra.mrb[0].mxu0 %v1625
      %v1696 = vpop.f32.mrb[0].mxu0
      %v1697 = vadd.f32 0.0, %v1696
      %v1698 = vpop.f32.mrb[0].mxu0
      %1699 = vmatprep.mubr.f32.mxu0 0.0
      %1700 = vmatmul.mubr.f32.gmra.mrb[0].mxu0 %v1628
      %v1701 = vpop.f32.mrb[0].mxu0
      %v1702 = vadd.f32 0.0, %v1701
      %v1703 = vpop.f32.mrb[0].mxu0
      %1704 = vdwg.mxu0
      %v1706 = vsel %vm532, %v1127, 0
      %v1709 = vsel %vm532, %v1132, 0
      %1711 = vmatprep.subr.mxu0 0.0
      %1712 = vmatpush1.msra.mxu0 %v1272
      %1713 = vmatprep.subr.mxu0 0.0
      %1714 = vmatpush1.msra.mxu0 %v1277
      %1715 = vmatprep.subr.mxu0 0.0
      %1716 = vmatpush1.msra.mxu0 0.0
      %1717 = vmatprep.subr.mxu0 0.0
      %1718 = vmatpush1.msra.mxu0 0.0
      %1719 = vmatprep.subr.mxu0 0.0
      %1720 = vmatpush1.msra.mxu0 0.0
      %1721 = vmatprep.subr.mxu0 0.0
      %1722 = vmatpush1.msra.mxu0 0.0
      %1723 = vmatprep.subr.mxu0 0.0
      %1724 = vmatpush1.msra.mxu0 0.0
      %1725 = vmatprep.subr.mxu0 0.0
      %1726 = vmatpush1.msra.mxu0 0.0
      %1727 = vmatprep.subr.mxu0 0.0
      %1728 = vmatpush1.msra.mxu0 0.0
      %1729 = vmatprep.subr.mxu0 0.0
      %1730 = vmatpush1.msra.mxu0 0.0
      %1731 = vmatprep.subr.mxu0 0.0
      %1732 = vmatpush1.msra.mxu0 0.0
      %1733 = vmatprep.subr.mxu0 0.0
      %1734 = vmatpush1.msra.mxu0 0.0
      %1735 = vmatprep.subr.mxu0 0.0
      %1736 = vmatpush1.msra.mxu0 0.0
      %1737 = vmatprep.subr.mxu0 0.0
      %1738 = vmatpush1.msra.mxu0 0.0
      %1739 = vmatprep.subr.mxu0 0.0
      %1740 = vmatpush1.msra.mxu0 0.0
      %1741 = vmatprep.subr.mxu0 0.0
      %1742 = vmatpush1.msra.mxu0 0.0
      %1743 = vmatprep.subr.mxu0 0.0
      %1744 = vmatpush1.msra.mxu0 0.0
      %1745 = vmatprep.subr.mxu0 0.0
      %1746 = vmatpush1.msra.mxu0 0.0
      %1747 = vmatprep.subr.mxu0 0.0
      %1748 = vmatpush1.msra.mxu0 0.0
      %1749 = vmatprep.subr.mxu0 0.0
      %1750 = vmatpush1.msra.mxu0 0.0
      %1751 = vmatprep.subr.mxu0 0.0
      %1752 = vmatpush1.msra.mxu0 0.0
      %1753 = vmatprep.subr.mxu0 0.0
      %1754 = vmatpush1.msra.mxu0 0.0
      %1755 = vmatprep.subr.mxu0 0.0
      %1756 = vmatpush1.msra.mxu0 0.0
      %1757 = vmatprep.subr.mxu0 0.0
      %1758 = vmatpush1.msra.mxu0 0.0
      %1759 = vmatprep.subr.mxu0 0.0
      %1760 = vmatpush1.msra.mxu0 0.0
      %1761 = vmatprep.subr.mxu0 0.0
      %1762 = vmatpush1.msra.mxu0 0.0
      %1763 = vmatprep.subr.mxu0 0.0
      %1764 = vmatpush1.msra.mxu0 0.0
      %1765 = vmatprep.subr.mxu0 0.0
      %1766 = vmatpush1.msra.mxu0 0.0
      %1767 = vmatprep.subr.mxu0 0.0
      %1768 = vmatpush1.msra.mxu0 0.0
      %1769 = vmatprep.subr.mxu0 0.0
      %1770 = vmatpush1.msra.mxu0 0.0
      %1771 = vmatprep.subr.mxu0 0.0
      %1772 = vmatpush1.msra.mxu0 0.0
      %1773 = vmatprep.subr.mxu0 0.0
      %1774 = vmatpush1.msra.mxu0 0.0
      %1775 = vmatprep.mubr.f32.mxu0 0.0
      %1776 = vmatmul.mubr.f32.gmra.mrb[0].mxu0 %v1706
      %v1777 = vpop.f32.mrb[0].mxu0
      %v1778 = vadd.f32 0.0, %v1777
      %v1779 = vpop.f32.mrb[0].mxu0
      %1780 = vmatprep.mubr.f32.mxu0 0.0
      %1781 = vmatmul.mubr.f32.gmra.mrb[0].mxu0 %v1709
      %v1782 = vpop.f32.mrb[0].mxu0
      %v1783 = vadd.f32 0.0, %v1782
      %v1784 = vpop.f32.mrb[0].mxu0
      %1785 = vdwg.mxu0
      %v1787 = vsel %vm532, %v1137, 0
      %v1790 = vsel %vm532, %v1142, 0
      %1792 = vmatprep.subr.mxu0 0.0
      %1793 = vmatpush1.msra.mxu0 %v1282
      %1794 = vmatprep.subr.mxu0 0.0
      %1795 = vmatpush1.msra.mxu0 %v1287
      %1796 = vmatprep.subr.mxu0 0.0
      %1797 = vmatpush1.msra.mxu0 0.0
      %1798 = vmatprep.subr.mxu0 0.0
      %1799 = vmatpush1.msra.mxu0 0.0
      %1800 = vmatprep.subr.mxu0 0.0
      %1801 = vmatpush1.msra.mxu0 0.0
      %1802 = vmatprep.subr.mxu0 0.0
      %1803 = vmatpush1.msra.mxu0 0.0
      %1804 = vmatprep.subr.mxu0 0.0
      %1805 = vmatpush1.msra.mxu0 0.0
      %1806 = vmatprep.subr.mxu0 0.0
      %1807 = vmatpush1.msra.mxu0 0.0
      %1808 = vmatprep.subr.mxu0 0.0
      %1809 = vmatpush1.msra.mxu0 0.0
      %1810 = vmatprep.subr.mxu0 0.0
      %1811 = vmatpush1.msra.mxu0 0.0
      %1812 = vmatprep.subr.mxu0 0.0
      %1813 = vmatpush1.msra.mxu0 0.0
      %1814 = vmatprep.subr.mxu0 0.0
      %1815 = vmatpush1.msra.mxu0 0.0
      %1816 = vmatprep.subr.mxu0 0.0
      %1817 = vmatpush1.msra.mxu0 0.0
      %1818 = vmatprep.subr.mxu0 0.0
      %1819 = vmatpush1.msra.mxu0 0.0
      %1820 = vmatprep.subr.mxu0 0.0
      %1821 = vmatpush1.msra.mxu0 0.0
      %1822 = vmatprep.subr.mxu0 0.0
      %1823 = vmatpush1.msra.mxu0 0.0
      %1824 = vmatprep.subr.mxu0 0.0
      %1825 = vmatpush1.msra.mxu0 0.0
      %1826 = vmatprep.subr.mxu0 0.0
      %1827 = vmatpush1.msra.mxu0 0.0
      %1828 = vmatprep.subr.mxu0 0.0
      %1829 = vmatpush1.msra.mxu0 0.0
      %1830 = vmatprep.subr.mxu0 0.0
      %1831 = vmatpush1.msra.mxu0 0.0
      %1832 = vmatprep.subr.mxu0 0.0
      %1833 = vmatpush1.msra.mxu0 0.0
      %1834 = vmatprep.subr.mxu0 0.0
      %1835 = vmatpush1.msra.mxu0 0.0
      %1836 = vmatprep.subr.mxu0 0.0
      %1837 = vmatpush1.msra.mxu0 0.0
      %1838 = vmatprep.subr.mxu0 0.0
      %1839 = vmatpush1.msra.mxu0 0.0
      %1840 = vmatprep.subr.mxu0 0.0
      %1841 = vmatpush1.msra.mxu0 0.0
      %1842 = vmatprep.subr.mxu0 0.0
      %1843 = vmatpush1.msra.mxu0 0.0
      %1844 = vmatprep.subr.mxu0 0.0
      %1845 = vmatpush1.msra.mxu0 0.0
      %1846 = vmatprep.subr.mxu0 0.0
      %1847 = vmatpush1.msra.mxu0 0.0
      %1848 = vmatprep.subr.mxu0 0.0
      %1849 = vmatpush1.msra.mxu0 0.0
      %1850 = vmatprep.subr.mxu0 0.0
      %1851 = vmatpush1.msra.mxu0 0.0
      %1852 = vmatprep.subr.mxu0 0.0
      %1853 = vmatpush1.msra.mxu0 0.0
      %1854 = vmatprep.subr.mxu0 0.0
      %1855 = vmatpush1.msra.mxu0 0.0
      %1856 = vmatprep.mubr.f32.mxu0 0.0
      %1857 = vmatmul.mubr.f32.gmra.mrb[0].mxu0 %v1787
      %v1858 = vpop.f32.mrb[0].mxu0
      %v1859 = vadd.f32 0.0, %v1858
      %v1860 = vpop.f32.mrb[0].mxu0
      %1861 = vmatprep.mubr.f32.mxu0 0.0
      %1862 = vmatmul.mubr.f32.gmra.mrb[0].mxu0 %v1790
      %v1863 = vpop.f32.mrb[0].mxu0
      %v1864 = vadd.f32 0.0, %v1863
      %v1865 = vpop.f32.mrb[0].mxu0
      %1866 = vdwg.mxu0
      %v1868 = vsel %vm532, %v1147, 0
      %v1871 = vsel %vm532, %v1152, 0
      %1873 = vmatprep.subr.mxu0 0.0
      %1874 = vmatpush1.msra.mxu0 %v1292
      %1875 = vmatprep.subr.mxu0 0.0
      %1876 = vmatpush1.msra.mxu0 %v1297
      %1877 = vmatprep.subr.mxu0 0.0
      %1878 = vmatpush1.msra.mxu0 0.0
      %1879 = vmatprep.subr.mxu0 0.0
      %1880 = vmatpush1.msra.mxu0 0.0
      %1881 = vmatprep.subr.mxu0 0.0
      %1882 = vmatpush1.msra.mxu0 0.0
      %1883 = vmatprep.subr.mxu0 0.0
      %1884 = vmatpush1.msra.mxu0 0.0
      %1885 = vmatprep.subr.mxu0 0.0
      %1886 = vmatpush1.msra.mxu0 0.0
      %1887 = vmatprep.subr.mxu0 0.0
      %1888 = vmatpush1.msra.mxu0 0.0
      %1889 = vmatprep.subr.mxu0 0.0
      %1890 = vmatpush1.msra.mxu0 0.0
      %1891 = vmatprep.subr.mxu0 0.0
      %1892 = vmatpush1.msra.mxu0 0.0
      %1893 = vmatprep.subr.mxu0 0.0
      %1894 = vmatpush1.msra.mxu0 0.0
      %1895 = vmatprep.subr.mxu0 0.0
      %1896 = vmatpush1.msra.mxu0 0.0
      %1897 = vmatprep.subr.mxu0 0.0
      %1898 = vmatpush1.msra.mxu0 0.0
      %1899 = vmatprep.subr.mxu0 0.0
      %1900 = vmatpush1.msra.mxu0 0.0
      %1901 = vmatprep.subr.mxu0 0.0
      %1902 = vmatpush1.msra.mxu0 0.0
      %1903 = vmatprep.subr.mxu0 0.0
      %1904 = vmatpush1.msra.mxu0 0.0
      %1905 = vmatprep.subr.mxu0 0.0
      %1906 = vmatpush1.msra.mxu0 0.0
      %1907 = vmatprep.subr.mxu0 0.0
      %1908 = vmatpush1.msra.mxu0 0.0
      %1909 = vmatprep.subr.mxu0 0.0
      %1910 = vmatpush1.msra.mxu0 0.0
      %1911 = vmatprep.subr.mxu0 0.0
      %1912 = vmatpush1.msra.mxu0 0.0
      %1913 = vmatprep.subr.mxu0 0.0
      %1914 = vmatpush1.msra.mxu0 0.0
      %1915 = vmatprep.subr.mxu0 0.0
      %1916 = vmatpush1.msra.mxu0 0.0
      %1917 = vmatprep.subr.mxu0 0.0
      %1918 = vmatpush1.msra.mxu0 0.0
      %1919 = vmatprep.subr.mxu0 0.0
      %1920 = vmatpush1.msra.mxu0 0.0
      %1921 = vmatprep.subr.mxu0 0.0
      %1922 = vmatpush1.msra.mxu0 0.0
      %1923 = vmatprep.subr.mxu0 0.0
      %1924 = vmatpush1.msra.mxu0 0.0
      %1925 = vmatprep.subr.mxu0 0.0
      %1926 = vmatpush1.msra.mxu0 0.0
      %1927 = vmatprep.subr.mxu0 0.0
      %1928 = vmatpush1.msra.mxu0 0.0
      %1929 = vmatprep.subr.mxu0 0.0
      %1930 = vmatpush1.msra.mxu0 0.0
      %1931 = vmatprep.subr.mxu0 0.0
      %1932 = vmatpush1.msra.mxu0 0.0
      %1933 = vmatprep.subr.mxu0 0.0
      %1934 = vmatpush1.msra.mxu0 0.0
      %1935 = vmatprep.subr.mxu0 0.0
      %1936 = vmatpush1.msra.mxu0 0.0
      %1937 = vmatprep.mubr.f32.mxu0 0.0
      %1938 = vmatmul.mubr.f32.gmra.mrb[0].mxu0 %v1868
      %v1939 = vpop.f32.mrb[0].mxu0
      %v1940 = vadd.f32 0.0, %v1939
      %v1941 = vpop.f32.mrb[0].mxu0
      %1942 = vmatprep.mubr.f32.mxu0 0.0
      %1943 = vmatmul.mubr.f32.gmra.mrb[0].mxu0 %v1871
      %v1944 = vpop.f32.mrb[0].mxu0
      %v1945 = vadd.f32 0.0, %v1944
      %v1946 = vpop.f32.mrb[0].mxu0
      %1947 = vdwg.mxu0
      %v1949 = vsel %vm532, %v1373, 0
      %v1952 = vsel %vm532, %v1378, 0
      %v1955 = vsel %vm532, %v1454, 0
      %v1958 = vsel %vm532, %v1459, 0
      %v1961 = vsel %vm532, %v1535, 0
      %v1964 = vsel %vm532, %v1540, 0
      %v1967 = vsel %vm532, %v1616, 0
      %v1970 = vsel %vm532, %v1621, 0
      %v1973 = vsel %vm532, %v1697, 0
      %v1976 = vsel %vm532, %v1702, 0
      %v1979 = vsel %vm532, %v1778, 0
      %v1982 = vsel %vm532, %v1783, 0
      %v1985 = vsel %vm532, %v1859, 0
      %v1988 = vsel %vm532, %v1864, 0
      %v1991 = vsel %vm532, %v1940, 0
      %v1994 = vsel %vm532, %v1945, 0
      %1996 = vmatprep.subr.mxu0 %v524
      %1997 = vmatpush1.msra.mxu0 %v523
      %1998 = vmatprep.subr.mxu0 %v526
      %1999 = vmatpush1.msra.mxu0 %v525
      %2000 = vmatprep.subr.mxu0 0.0
      %2001 = vmatpush1.msra.mxu0 0.0
      %2002 = vmatprep.subr.mxu0 0.0
      %2003 = vmatpush1.msra.mxu0 0.0
      %2004 = vmatprep.subr.mxu0 0.0
      %2005 = vmatpush1.msra.mxu0 0.0
      %2006 = vmatprep.subr.mxu0 0.0
      %2007 = vmatpush1.msra.mxu0 0.0
      %2008 = vmatprep.subr.mxu0 0.0
      %2009 = vmatpush1.msra.mxu0 0.0
      %2010 = vmatprep.subr.mxu0 0.0
      %2011 = vmatpush1.msra.mxu0 0.0
      %2012 = vmatprep.subr.mxu0 0.0
      %2013 = vmatpush1.msra.mxu0 0.0
      %2014 = vmatprep.subr.mxu0 0.0
      %2015 = vmatpush1.msra.mxu0 0.0
      %2016 = vmatprep.subr.mxu0 0.0
      %2017 = vmatpush1.msra.mxu0 0.0
      %2018 = vmatprep.subr.mxu0 0.0
      %2019 = vmatpush1.msra.mxu0 0.0
      %2020 = vmatprep.subr.mxu0 0.0
      %2021 = vmatpush1.msra.mxu0 0.0
      %2022 = vmatprep.subr.mxu0 0.0
      %2023 = vmatpush1.msra.mxu0 0.0
      %2024 = vmatprep.subr.mxu0 0.0
      %2025 = vmatpush1.msra.mxu0 0.0
      %2026 = vmatprep.subr.mxu0 0.0
      %2027 = vmatpush1.msra.mxu0 0.0
      %2028 = vmatprep.subr.mxu0 0.0
      %2029 = vmatpush1.msra.mxu0 0.0
      %2030 = vmatprep.subr.mxu0 0.0
      %2031 = vmatpush1.msra.mxu0 0.0
      %2032 = vmatprep.subr.mxu0 0.0
      %2033 = vmatpush1.msra.mxu0 0.0
      %2034 = vmatprep.subr.mxu0 0.0
      %2035 = vmatpush1.msra.mxu0 0.0
      %2036 = vmatprep.subr.mxu0 0.0
      %2037 = vmatpush1.msra.mxu0 0.0
      %2038 = vmatprep.subr.mxu0 0.0
      %2039 = vmatpush1.msra.mxu0 0.0
      %2040 = vmatprep.subr.mxu0 0.0
      %2041 = vmatpush1.msra.mxu0 0.0
      %2042 = vmatprep.subr.mxu0 0.0
      %2043 = vmatpush1.msra.mxu0 0.0
      %2044 = vmatprep.subr.mxu0 0.0
      %2045 = vmatpush1.msra.mxu0 0.0
      %2046 = vmatprep.subr.mxu0 0.0
      %2047 = vmatpush1.msra.mxu0 0.0
      %2048 = vmatprep.subr.mxu0 0.0
      %2049 = vmatpush1.msra.mxu0 0.0
      %2050 = vmatprep.subr.mxu0 0.0
      %2051 = vmatpush1.msra.mxu0 0.0
      %2052 = vmatprep.subr.mxu0 0.0
      %2053 = vmatpush1.msra.mxu0 0.0
      %2054 = vmatprep.subr.mxu0 0.0
      %2055 = vmatpush1.msra.mxu0 0.0
      %2056 = vmatprep.subr.mxu0 0.0
      %2057 = vmatpush1.msra.mxu0 0.0
      %2058 = vmatprep.subr.mxu0 0.0
      %2059 = vmatpush1.msra.mxu0 0.0
      %2060 = vmatprep.mubr.f32.mxu0 0.0
      %2061 = vmatmul.mubr.f32.gmra.mrb[0].mxu0 %v1949
      %v2062 = vpop.f32.mrb[0].mxu0
      %v2063 = vadd.f32 0.0, %v2062
      %v2064 = vpop.f32.mrb[0].mxu0
      %v2065 = vadd.f32 0.0, %v2064
      %2066 = vmatprep.mubr.f32.mxu0 0.0
      %2067 = vmatmul.mubr.f32.gmra.mrb[0].mxu0 %v1952
      %v2068 = vpop.f32.mrb[0].mxu0
      %v2069 = vadd.f32 0.0, %v2068
      %v2070 = vpop.f32.mrb[0].mxu0
      %v2071 = vadd.f32 0.0, %v2070
      %2072 = vmatprep.mubr.f32.mxu0 0.0
      %2073 = vmatmul.mubr.f32.gmra.mrb[0].mxu0 %v1955
      %v2074 = vpop.f32.mrb[0].mxu0
      %v2075 = vadd.f32 0.0, %v2074
      %v2076 = vpop.f32.mrb[0].mxu0
      %v2077 = vadd.f32 0.0, %v2076
      %2078 = vmatprep.mubr.f32.mxu0 0.0
      %2079 = vmatmul.mubr.f32.gmra.mrb[0].mxu0 %v1958
      %v2080 = vpop.f32.mrb[0].mxu0
      %v2081 = vadd.f32 0.0, %v2080
      %v2082 = vpop.f32.mrb[0].mxu0
      %v2083 = vadd.f32 0.0, %v2082
      %2084 = vmatprep.mubr.f32.mxu0 0.0
      %2085 = vmatmul.mubr.f32.gmra.mrb[0].mxu0 %v1961
      %v2086 = vpop.f32.mrb[0].mxu0
      %v2087 = vadd.f32 0.0, %v2086
      %v2088 = vpop.f32.mrb[0].mxu0
      %v2089 = vadd.f32 0.0, %v2088
      %2090 = vmatprep.mubr.f32.mxu0 0.0
      %2091 = vmatmul.mubr.f32.gmra.mrb[0].mxu0 %v1964
      %v2092 = vpop.f32.mrb[0].mxu0
      %v2093 = vadd.f32 0.0, %v2092
      %v2094 = vpop.f32.mrb[0].mxu0
      %v2095 = vadd.f32 0.0, %v2094
      %2096 = vmatprep.mubr.f32.mxu0 0.0
      %2097 = vmatmul.mubr.f32.gmra.mrb[0].mxu0 %v1967
      %v2098 = vpop.f32.mrb[0].mxu0
      %v2099 = vadd.f32 0.0, %v2098
      %v2100 = vpop.f32.mrb[0].mxu0
      %v2101 = vadd.f32 0.0, %v2100
      %2102 = vmatprep.mubr.f32.mxu0 0.0
      %2103 = vmatmul.mubr.f32.gmra.mrb[0].mxu0 %v1970
      %v2104 = vpop.f32.mrb[0].mxu0
      %v2105 = vadd.f32 0.0, %v2104
      %v2106 = vpop.f32.mrb[0].mxu0
      %v2107 = vadd.f32 0.0, %v2106
      %2108 = vmatprep.mubr.f32.mxu0 0.0
      %2109 = vmatmul.mubr.f32.gmra.mrb[0].mxu0 %v1973
      %v2110 = vpop.f32.mrb[0].mxu0
      %v2111 = vadd.f32 0.0, %v2110
      %v2112 = vpop.f32.mrb[0].mxu0
      %v2113 = vadd.f32 0.0, %v2112
      %2114 = vmatprep.mubr.f32.mxu0 0.0
      %2115 = vmatmul.mubr.f32.gmra.mrb[0].mxu0 %v1976
      %v2116 = vpop.f32.mrb[0].mxu0
      %v2117 = vadd.f32 0.0, %v2116
      %v2118 = vpop.f32.mrb[0].mxu0
      %v2119 = vadd.f32 0.0, %v2118
      %2120 = vmatprep.mubr.f32.mxu0 0.0
      %2121 = vmatmul.mubr.f32.gmra.mrb[0].mxu0 %v1979
      %v2122 = vpop.f32.mrb[0].mxu0
      %v2123 = vadd.f32 0.0, %v2122
      %v2124 = vpop.f32.mrb[0].mxu0
      %v2125 = vadd.f32 0.0, %v2124
      %2126 = vmatprep.mubr.f32.mxu0 0.0
      %2127 = vmatmul.mubr.f32.gmra.mrb[0].mxu0 %v1982
      %v2128 = vpop.f32.mrb[0].mxu0
      %v2129 = vadd.f32 0.0, %v2128
      %v2130 = vpop.f32.mrb[0].mxu0
      %v2131 = vadd.f32 0.0, %v2130
      %2132 = vmatprep.mubr.f32.mxu0 0.0
      %2133 = vmatmul.mubr.f32.gmra.mrb[0].mxu0 %v1985
      %v2134 = vpop.f32.mrb[0].mxu0
      %v2135 = vadd.f32 0.0, %v2134
      %v2136 = vpop.f32.mrb[0].mxu0
      %v2137 = vadd.f32 0.0, %v2136
      %2138 = vmatprep.mubr.f32.mxu0 0.0
      %2139 = vmatmul.mubr.f32.gmra.mrb[0].mxu0 %v1988
      %v2140 = vpop.f32.mrb[0].mxu0
      %v2141 = vadd.f32 0.0, %v2140
      %v2142 = vpop.f32.mrb[0].mxu0
      %v2143 = vadd.f32 0.0, %v2142
      %2144 = vmatprep.mubr.f32.mxu0 0.0
      %2145 = vmatmul.mubr.f32.gmra.mrb[0].mxu0 %v1991
      %v2146 = vpop.f32.mrb[0].mxu0
      %v2147 = vadd.f32 0.0, %v2146
      %v2148 = vpop.f32.mrb[0].mxu0
      %v2149 = vadd.f32 0.0, %v2148
      %2150 = vmatprep.mubr.f32.mxu0 0.0
      %2151 = vmatmul.mubr.f32.gmra.mrb[0].mxu0 %v1994
      %v2152 = vpop.f32.mrb[0].mxu0
      %v2153 = vadd.f32 0.0, %v2152
      %v2154 = vpop.f32.mrb[0].mxu0
      %v2155 = vadd.f32 0.0, %v2154
      %2156 = vdwg.mxu0
      %v2157 = vmul.f32 %v2063, %v519
      %v2158 = vmul.f32 %v2065, %v520
      %v2159 = vmul.f32 %v2069, %v521
      %v2160 = vmul.f32 %v2071, %v522
      %v2161 = vmul.f32 %v2075, %v519
      %v2162 = vmul.f32 %v2077, %v520
      %v2163 = vmul.f32 %v2081, %v521
      %v2164 = vmul.f32 %v2083, %v522
      %v2165 = vmul.f32 %v2087, %v519
      %v2166 = vmul.f32 %v2089, %v520
      %v2167 = vmul.f32 %v2093, %v521
      %v2168 = vmul.f32 %v2095, %v522
      %v2169 = vmul.f32 %v2099, %v519
      %v2170 = vmul.f32 %v2101, %v520
      %v2171 = vmul.f32 %v2105, %v521
      %v2172 = vmul.f32 %v2107, %v522
      %v2173 = vmul.f32 %v2111, %v519
      %v2174 = vmul.f32 %v2113, %v520
      %v2175 = vmul.f32 %v2117, %v521
      %v2176 = vmul.f32 %v2119, %v522
      %v2177 = vmul.f32 %v2123, %v519
      %v2178 = vmul.f32 %v2125, %v520
      %v2179 = vmul.f32 %v2129, %v521
      %v2180 = vmul.f32 %v2131, %v522
      %v2181 = vmul.f32 %v2135, %v519
      %v2182 = vmul.f32 %v2137, %v520
      %v2183 = vmul.f32 %v2141, %v521
      %v2184 = vmul.f32 %v2143, %v522
      %v2185 = vmul.f32 %v2147, %v519
      %v2186 = vmul.f32 %v2149, %v520
      %v2187 = vmul.f32 %v2153, %v521
      %v2188 = vmul.f32 %v2155, %v522
      %v2189 = vadd.f32 %v2157, %v2159
      %v2190 = vrot.slane %v2189, 4
      %v2191 = vadd.f32 %v2189, %v2190
      %v2192 = vrot.slane %v2191, 2
      %v2193 = vadd.f32 %v2191, %v2192
      %v2194 = vrot.slane %v2193, 1
      %v2195 = vadd.f32 %v2193, %v2194
      %v2196 = vadd.f32 %v2158, %v2160
      %v2197 = vrot.slane %v2196, 4
      %v2198 = vadd.f32 %v2196, %v2197
      %v2199 = vrot.slane %v2198, 2
      %v2200 = vadd.f32 %v2198, %v2199
      %v2201 = vrot.slane %v2200, 1
      %v2202 = vadd.f32 %v2200, %v2201
      %v2203 = vadd.f32 %v2161, %v2163
      %v2204 = vrot.slane %v2203, 4
      %v2205 = vadd.f32 %v2203, %v2204
      %v2206 = vrot.slane %v2205, 2
      %v2207 = vadd.f32 %v2205, %v2206
      %v2208 = vrot.slane %v2207, 1
      %v2209 = vadd.f32 %v2207, %v2208
      %v2210 = vadd.f32 %v2162, %v2164
      %v2211 = vrot.slane %v2210, 4
      %v2212 = vadd.f32 %v2210, %v2211
      %v2213 = vrot.slane %v2212, 2
      %v2214 = vadd.f32 %v2212, %v2213
      %v2215 = vrot.slane %v2214, 1
      %v2216 = vadd.f32 %v2214, %v2215
      %v2217 = vadd.f32 %v2165, %v2167
      %v2218 = vrot.slane %v2217, 4
      %v2219 = vadd.f32 %v2217, %v2218
      %v2220 = vrot.slane %v2219, 2
      %v2221 = vadd.f32 %v2219, %v2220
      %v2222 = vrot.slane %v2221, 1
      %v2223 = vadd.f32 %v2221, %v2222
      %v2224 = vadd.f32 %v2166, %v2168
      %v2225 = vrot.slane %v2224, 4
      %v2226 = vadd.f32 %v2224, %v2225
      %v2227 = vrot.slane %v2226, 2
      %v2228 = vadd.f32 %v2226, %v2227
      %v2229 = vrot.slane %v2228, 1
      %v2230 = vadd.f32 %v2228, %v2229
      %v2231 = vadd.f32 %v2169, %v2171
      %v2232 = vrot.slane %v2231, 4
      %v2233 = vadd.f32 %v2231, %v2232
      %v2234 = vrot.slane %v2233, 2
      %v2235 = vadd.f32 %v2233, %v2234
      %v2236 = vrot.slane %v2235, 1
      %v2237 = vadd.f32 %v2235, %v2236
      %v2238 = vadd.f32 %v2170, %v2172
      %v2239 = vrot.slane %v2238, 4
      %v2240 = vadd.f32 %v2238, %v2239
      %v2241 = vrot.slane %v2240, 2
      %v2242 = vadd.f32 %v2240, %v2241
      %v2243 = vrot.slane %v2242, 1
      %v2244 = vadd.f32 %v2242, %v2243
      %v2245 = vadd.f32 %v2173, %v2175
      %v2246 = vrot.slane %v2245, 4
      %v2247 = vadd.f32 %v2245, %v2246
      %v2248 = vrot.slane %v2247, 2
      %v2249 = vadd.f32 %v2247, %v2248
      %v2250 = vrot.slane %v2249, 1
      %v2251 = vadd.f32 %v2249, %v2250
      %v2252 = vadd.f32 %v2174, %v2176
      %v2253 = vrot.slane %v2252, 4
      %v2254 = vadd.f32 %v2252, %v2253
      %v2255 = vrot.slane %v2254, 2
      %v2256 = vadd.f32 %v2254, %v2255
      %v2257 = vrot.slane %v2256, 1
      %v2258 = vadd.f32 %v2256, %v2257
      %v2259 = vadd.f32 %v2177, %v2179
      %v2260 = vrot.slane %v2259, 4
      %v2261 = vadd.f32 %v2259, %v2260
      %v2262 = vrot.slane %v2261, 2
      %v2263 = vadd.f32 %v2261, %v2262
      %v2264 = vrot.slane %v2263, 1
      %v2265 = vadd.f32 %v2263, %v2264
      %v2266 = vadd.f32 %v2178, %v2180
      %v2267 = vrot.slane %v2266, 4
      %v2268 = vadd.f32 %v2266, %v2267
      %v2269 = vrot.slane %v2268, 2
      %v2270 = vadd.f32 %v2268, %v2269
      %v2271 = vrot.slane %v2270, 1
      %v2272 = vadd.f32 %v2270, %v2271
      %v2273 = vadd.f32 %v2181, %v2183
      %v2274 = vrot.slane %v2273, 4
      %v2275 = vadd.f32 %v2273, %v2274
      %v2276 = vrot.slane %v2275, 2
      %v2277 = vadd.f32 %v2275, %v2276
      %v2278 = vrot.slane %v2277, 1
      %v2279 = vadd.f32 %v2277, %v2278
      %v2280 = vadd.f32 %v2182, %v2184
      %v2281 = vrot.slane %v2280, 4
      %v2282 = vadd.f32 %v2280, %v2281
      %v2283 = vrot.slane %v2282, 2
      %v2284 = vadd.f32 %v2282, %v2283
      %v2285 = vrot.slane %v2284, 1
      %v2286 = vadd.f32 %v2284, %v2285
      %v2287 = vadd.f32 %v2185, %v2187
      %v2288 = vrot.slane %v2287, 4
      %v2289 = vadd.f32 %v2287, %v2288
      %v2290 = vrot.slane %v2289, 2
      %v2291 = vadd.f32 %v2289, %v2290
      %v2292 = vrot.slane %v2291, 1
      %v2293 = vadd.f32 %v2291, %v2292
      %v2294 = vadd.f32 %v2186, %v2188
      %v2295 = vrot.slane %v2294, 4
      %v2296 = vadd.f32 %v2294, %v2295
      %v2297 = vrot.slane %v2296, 2
      %v2298 = vadd.f32 %v2296, %v2297
      %v2299 = vrot.slane %v2298, 1
      %v2300 = vadd.f32 %v2298, %v2299
      %v2301 = vld [vmem:[%s344] sm:$0xff]
      %v2302 = vld [vmem:[%s344 + $0x8] sm:$0xff]
      %v2303 = vld [vmem:[%s344 + $0x10] sm:$0xff]
      %v2304 = vld [vmem:[%s344 + $0x18] sm:$0xff]
      %v2305 = vld [vmem:[%s344 + $0x20] sm:$0xff]
      %v2306 = vld [vmem:[%s344 + $0x28] sm:$0xff]
      %v2307 = vld [vmem:[%s337] sm:$0xff]
      %2308 = vxpose.xlu0.b32.start [1/16] %v2307, 128
      %2309 = vxpose.xlu0.b32.cont [2/16] 0.0, 128
      %2310 = vxpose.xlu0.b32.cont [3/16] 0.0, 128
      %2311 = vxpose.xlu0.b32.cont [4/16] 0.0, 128
      %2312 = vxpose.xlu0.b32.cont [5/16] 0.0, 128
      %2313 = vxpose.xlu0.b32.cont [6/16] 0.0, 128
      %2314 = vxpose.xlu0.b32.cont [7/16] 0.0, 128
      %2315 = vxpose.xlu0.b32.cont [8/16] 0.0, 128
      %2316 = vxpose.xlu0.b32.cont [9/16] 0.0, 128
      %2317 = vxpose.xlu0.b32.cont [10/16] 0.0, 128
      %2318 = vxpose.xlu0.b32.cont [11/16] 0.0, 128
      %2319 = vxpose.xlu0.b32.cont [12/16] 0.0, 128
      %2320 = vxpose.xlu0.b32.cont [13/16] 0.0, 128
      %2321 = vxpose.xlu0.b32.cont [14/16] 0.0, 128
      %2322 = vxpose.xlu0.b32.cont [15/16] 0.0, 128
      %2323 = vxpose.xlu0.b32.end [16/16] 0.0, 128
      %v2324 = vpop.trf.xlu0
      %v2325 = vpop.trf.xlu0
      %v2326 = vpop.trf.xlu0
      %v2327 = vpop.trf.xlu0
      %v2328 = vpop.trf.xlu0
      %v2329 = vpop.trf.xlu0
      %v2330 = vpop.trf.xlu0
      %v2331 = vpop.trf.xlu0
      %v2332 = vpop.trf.xlu0
      %v2333 = vpop.trf.xlu0
      %v2334 = vpop.trf.xlu0
      %v2335 = vpop.trf.xlu0
      %v2336 = vpop.trf.xlu0
      %v2337 = vpop.trf.xlu0
      %v2338 = vpop.trf.xlu0
      %v2339 = vpop.trf.xlu0
      %vm2356 = vcmask 1041409
      %v2357 = vsel %vm2356, %v2209, %v2195
      %vm2358 = vcmask 1042434
      %v2359 = vsel %vm2358, %v2223, %v2357
      %vm2360 = vcmask 1043459
      %v2361 = vsel %vm2360, %v2237, %v2359
      %vm2362 = vcmask 1044484
      %v2363 = vsel %vm2362, %v2251, %v2361
      %vm2364 = vcmask 1045509
      %v2365 = vsel %vm2364, %v2265, %v2363
      %vm2366 = vcmask 1046534
      %v2367 = vsel %vm2366, %v2279, %v2365
      %vm2368 = vcmask 1047559
      %v2369 = vsel %vm2368, %v2293, %v2367
      %v2370 = vsel %vm2356, %v2216, %v2202
      %v2371 = vsel %vm2358, %v2230, %v2370
      %v2372 = vsel %vm2360, %v2244, %v2371
      %v2373 = vsel %vm2362, %v2258, %v2372
      %v2374 = vsel %vm2364, %v2272, %v2373
      %v2375 = vsel %vm2366, %v2286, %v2374
      %v2376 = vsel %vm2368, %v2300, %v2375
      %vm2379 = vcmask 64512
      %v2381 = vsel %vm2379, %v2324, 0
      %v2384 = vsel %vm2379, %v2325, 0
      %v2387 = vsel %vm2379, %v2326, 0
      %2389 = vmatprep.subr.mxu0 %v2376
      %2390 = vmatpush1.msra.mxu0 %v2369
      %2391 = vmatprep.subr.mxu0 0.0
      %2392 = vmatpush1.msra.mxu0 0.0
      %2393 = vmatprep.subr.mxu0 0.0
      %2394 = vmatpush1.msra.mxu0 0.0
      %2395 = vmatprep.subr.mxu0 0.0
      %2396 = vmatpush1.msra.mxu0 0.0
      %2397 = vmatprep.subr.mxu0 0.0
      %2398 = vmatpush1.msra.mxu0 0.0
      %2399 = vmatprep.subr.mxu0 0.0
      %2400 = vmatpush1.msra.mxu0 0.0
      %2401 = vmatprep.subr.mxu0 0.0
      %2402 = vmatpush1.msra.mxu0 0.0
      %2403 = vmatprep.subr.mxu0 0.0
      %2404 = vmatpush1.msra.mxu0 0.0
      %2405 = vmatprep.subr.mxu0 0.0
      %2406 = vmatpush1.msra.mxu0 0.0
      %2407 = vmatprep.subr.mxu0 0.0
      %2408 = vmatpush1.msra.mxu0 0.0
      %2409 = vmatprep.subr.mxu0 0.0
      %2410 = vmatpush1.msra.mxu0 0.0
      %2411 = vmatprep.subr.mxu0 0.0
      %2412 = vmatpush1.msra.mxu0 0.0
      %2413 = vmatprep.subr.mxu0 0.0
      %2414 = vmatpush1.msra.mxu0 0.0
      %2415 = vmatprep.subr.mxu0 0.0
      %2416 = vmatpush1.msra.mxu0 0.0
      %2417 = vmatprep.subr.mxu0 0.0
      %2418 = vmatpush1.msra.mxu0 0.0
      %2419 = vmatprep.subr.mxu0 0.0
      %2420 = vmatpush1.msra.mxu0 0.0
      %2421 = vmatprep.subr.mxu0 0.0
      %2422 = vmatpush1.msra.mxu0 0.0
      %2423 = vmatprep.subr.mxu0 0.0
      %2424 = vmatpush1.msra.mxu0 0.0
      %2425 = vmatprep.subr.mxu0 0.0
      %2426 = vmatpush1.msra.mxu0 0.0
      %2427 = vmatprep.subr.mxu0 0.0
      %2428 = vmatpush1.msra.mxu0 0.0
      %2429 = vmatprep.subr.mxu0 0.0
      %2430 = vmatpush1.msra.mxu0 0.0
      %2431 = vmatprep.subr.mxu0 0.0
      %2432 = vmatpush1.msra.mxu0 0.0
      %2433 = vmatprep.subr.mxu0 0.0
      %2434 = vmatpush1.msra.mxu0 0.0
      %2435 = vmatprep.subr.mxu0 0.0
      %2436 = vmatpush1.msra.mxu0 0.0
      %2437 = vmatprep.subr.mxu0 0.0
      %2438 = vmatpush1.msra.mxu0 0.0
      %2439 = vmatprep.subr.mxu0 0.0
      %2440 = vmatpush1.msra.mxu0 0.0
      %2441 = vmatprep.subr.mxu0 0.0
      %2442 = vmatpush1.msra.mxu0 0.0
      %2443 = vmatprep.subr.mxu0 0.0
      %2444 = vmatpush1.msra.mxu0 0.0
      %2445 = vmatprep.subr.mxu0 0.0
      %2446 = vmatpush1.msra.mxu0 0.0
      %2447 = vmatprep.subr.mxu0 0.0
      %2448 = vmatpush1.msra.mxu0 0.0
      %2449 = vmatprep.subr.mxu0 0.0
      %2450 = vmatpush1.msra.mxu0 0.0
      %2451 = vmatprep.subr.mxu0 0.0
      %2452 = vmatpush1.msra.mxu0 0.0
      %2453 = vmatprep.mubr.f32.mxu0 0.0
      %2454 = vmatmul.mubr.f32.gmra.mrb[0].mxu0 %v2381
      %v2455 = vpop.f32.mrb[0].mxu0
      %v2456 = vadd.f32 0.0, %v2455
      %v2457 = vpop.f32.mrb[0].mxu0
      %v2458 = vadd.f32 0.0, %v2457
      %2459 = vmatprep.mubr.f32.mxu0 0.0
      %2460 = vmatmul.mubr.f32.gmra.mrb[0].mxu0 %v2384
      %v2461 = vpop.f32.mrb[0].mxu0
      %v2462 = vadd.f32 0.0, %v2461
      %v2463 = vpop.f32.mrb[0].mxu0
      %v2464 = vadd.f32 0.0, %v2463
      %2465 = vmatprep.mubr.f32.mxu0 0.0
      %2466 = vmatmul.mubr.f32.gmra.mrb[0].mxu0 %v2387
      %v2467 = vpop.f32.mrb[0].mxu0
      %v2468 = vadd.f32 0.0, %v2467
      %v2469 = vpop.f32.mrb[0].mxu0
      %v2470 = vadd.f32 0.0, %v2469
      %2471 = vdwg.mxu0
      %v2472 = vadd.f32 %v2301, %v2456
      %v2473 = vadd.f32 %v2302, %v2458
      %v2474 = vadd.f32 %v2303, %v2462
      %v2475 = vadd.f32 %v2304, %v2464
      %v2476 = vadd.f32 %v2305, %v2468
      %v2477 = vadd.f32 %v2306, %v2470
      %2478 = vst [vmem:[%s344] sm:$0xff] %v2472
      %2479 = vst [vmem:[%s344 + $0x8] sm:$0xff] %v2473
      %2480 = vst [vmem:[%s344 + $0x10] sm:$0xff] %v2474
      %2481 = vst [vmem:[%s344 + $0x18] sm:$0xff] %v2475
      %2482 = vst [vmem:[%s344 + $0x20] sm:$0xff] %v2476
      %2483 = vst [vmem:[%s344 + $0x28] sm:$0xff] %v2477
      %s2484 = smul.u32 3, %s22
      %p2485 = scmp.lt.s32.totalorder %s2484, 5
      %s2486 = scalar_select %p2485, %s2484, 5
      %s2487 = smul.addr %s2486, 2
      %s2488 = smul.addr %s2487, 8
      %s2489 = scalar_lea.vmem %s7, %s2488
      // Predicated region
      $region53: #{ppgn_layer_forward.1} parent=47 // pred_check
        %p2490 = pneg %p216
      $region54: #{ppgn_layer_forward.1} parent=47 // pred_check_branch
        %2492 = sbr.rel (%p2490) target = $region56
      $region55: #{ppgn_layer_forward.1} parent=47 // pred_region
        %s2493 = smul.u32 3, %s22
      $region56: #{ppgn_layer_forward.1} parent=47 // pred_fallthru
        _
    $region48: #{ppgn_layer_forward.1} parent=5 // pred_fallthru
      _
    %p2494 = scmp.le.s32.totalorder 2, %s13
    // Predicated region
    $region57: #{ppgn_layer_forward.1} parent=5 // pred_check
      %p2495 = pneg %p2494
    $region58: #{ppgn_layer_forward.1} parent=5 // pred_check_branch
      %2497 = sbr.rel (%p2495) target = $region60
    $region59: #{ppgn_layer_forward.1} parent=5 // pred_region
      %s2498 = ssub.s32 %s13, 2
      // Predicated region
      $region61: #{ppgn_layer_forward.1} parent=59 // pred_check
        %p2499 = pneg %p222
      $region62: #{ppgn_layer_forward.1} parent=59 // pred_check_branch
        %2501 = sbr.rel (%p2499) target = $region64
      $region63: #{ppgn_layer_forward.1} parent=59 // pred_region
        %s2502 = smul.u32 3, %s24
        %p2503 = scmp.lt.s32.totalorder %s2502, 5
        %s2504 = scalar_select %p2503, %s2502, 5
        %s2505 = smul.addr %s2504, 2
        %s2506 = smul.addr %s2505, 8
        %s2507 = scalar_lea.vmem %s7, %s2506
      $region64: #{ppgn_layer_forward.1} parent=59 // pred_fallthru
        _
    $region60: #{ppgn_layer_forward.1} parent=5 // pred_fallthru
      _
  $region6: #{ppgn_layer_forward.1} parent=0 // loop_footer
    %s17 = sadd.s32 1, %s13
  $region7: #{ppgn_layer_forward.1} parent=0 // loop_footer_branch
    %12 = sbr.rel target = $region3
  $region8: #{ppgn_layer_forward.1} parent=0 // loop_exit
    _

</llo_original>
